<compile_context>
chip_gen: v7x
topology: tpu7x:2x2x1
jax: 0.10.0
libtpu: 0.0.40
codegen_flags: <defaults>
</compile_context>

<pallas_src>
import jax
import jax.numpy as jnp
import numpy as np
from jax.experimental import pallas as pl
from jax.experimental.pallas import tpu as pltpu

LRELU_SLOPE = 0.1


def _round_up(v, m):
    return ((v + m - 1) // m) * m


def _make_mrf_kernel(steps, *, T_true, T_tile, W0, HLp, Cp, n_blocks, mxu_dtype):
    """steps: tuple (per res-block) of tuples (kernel_size, dilation) for the layer that
    actually contributes (the last layer of each dilation group)."""
    inv_nb = 1.0 / float(n_blocks)

    def kernel(x_hbm, *refs):
        out_ref, xbuf, sem = refs[-3], refs[-2], refs[-1]
        params = refs[:-3]                       # flat [Wmat0, b0, Wmat1, b1, ...]

        n = pl.program_id(0)                     # batch index   ("parallel")
        i = pl.program_id(1)                     # time-tile idx ("arbitrary")
        nT = pl.num_programs(1)

        def start_fetch(ti, slot):
            start = pl.multiple_of(ti * T_tile, 8)
            pltpu.make_async_copy(
                x_hbm.at[n, pl.ds(start, W0), :],
                xbuf.at[slot], sem.at[slot]).start()

        # Prime the pipeline at the first time-tile of every batch row.
        @pl.when(i == 0)
        def _():
            start_fetch(0, 0)

        slot = i % 2
        # Wait for the current overlapping window (tile + cumulative dilation halo).
        pltpu.make_async_copy(
            x_hbm.at[n, pl.ds(pl.multiple_of(i * T_tile, 8), W0), :],
            xbuf.at[slot], sem.at[slot]).wait()

        # Prefetch the next window while this tile is being computed.
        @pl.when(i + 1 < nT)
        def _():
            start_fetch(i + 1, 1 - slot)

        xw = xbuf[slot]                          # (W0, Cp) f32, includes halo rows

        # Rows of the window that map to real sequence positions [0, T): masking the
        # post-LeakyReLU activation outside this range reproduces Conv1d's per-layer
        # 'same' zero padding at the sequence edges exactly (hoisted, reused per layer).
        gpos = jax.lax.broadcasted_iota(jnp.int32, (W0, Cp), 0) + (i * T_tile - HLp)
        inside = jnp.logical_and(gpos >= 0, gpos < T_true)

        res = jnp.zeros((W0, Cp), jnp.float32)
        pi = 0
        for block in steps:                      # res blocks (small static unroll)
            xb = xw
            for (K, d) in block:                 # contributing dilation layers
                w = params[2 * pi][...]          # (K*Cp, Cp)  in mxu_dtype
                b = params[2 * pi + 1][...]      # (1, Cp)     f32
                pi += 1

                a = jnp.where(xb > 0, xb, LRELU_SLOPE * xb)   # LeakyReLU (VPU)
                a = jnp.where(inside, a, 0.0)                 # 'same' zero padding

                left = (d * (K - 1)) // 2
                right = d * (K - 1) - left
                if left or right:
                    pieces = []
                    if left:
                        pieces.append(jnp.zeros((left, Cp), jnp.float32))
                    pieces.append(a)
                    if right:
                        pieces.append(jnp.zeros((right, Cp), jnp.float32))
                    ap = jnp.concatenate(pieces, axis=0)       # (W0 + d*(K-1), Cp)
                else:
                    ap = a

                # im2col: K statically shifted views, concatenated along lanes.
                if K > 1:
                    slab = jnp.concatenate(
                        [ap[k * d:k * d + W0, :] for k in range(K)], axis=1)
                else:
                    slab = ap                                   # (W0, K*Cp)

                # One wide MXU matmul per layer, f32 accumulation.
                conv = jnp.dot(slab.astype(mxu_dtype), w,
                               preferred_element_type=jnp.float32)
                xb = xb + (conv + b)                            # bias + residual
            res = res + xb

        out_ref[...] = (res[HLp:HLp + T_tile, :] * inv_nb).astype(out_ref.dtype)

    return kernel


def mrf_pallas(x_nct, params, k_r, D_r, *, tile_t=512, mxu_dtype=jnp.float32):
    """x_nct: (N, C, T) float32, PyTorch NCT layout.
    params[n][m][l] = (w (Cout, Cin, K), b (Cout,)) for ResBlock n, group m, layer l.
    mxu_dtype=jnp.bfloat16 enables the v6e/v7x fast MXU path (f32 accumulation kept)."""
    N, C, T = x_nct.shape
    n_blocks = len(k_r)
    Cp = _round_up(C, 128)                       # lane-dense channel padding

    # --- contributing layers (last layer of each dilation group) + cumulative halos ---
    steps, kern_args, in_specs = [], [], []
    HL = HR = 0
    for n, kn in enumerate(k_r):
        blk, L, R = [], 0, 0
        for m in range(len(D_r[n])):
            w, b = params[n][m][-1]              # only the last layer contributes
            d = int(D_r[n][m][-1])
            blk.append((kn, d))
            pad = d * (kn - 1)
            L += pad // 2
            R += pad - pad // 2
            # (Cout, Cin, K) -> (K, Cin, Cout) -> zero-pad channels -> (K*Cp, Cp)
            wt = jnp.transpose(w, (2, 1, 0))
            wp = jnp.zeros((kn, Cp, Cp), jnp.float32).at[:, :C, :C].set(wt)
            kern_args.append(wp.reshape(kn * Cp, Cp).astype(mxu_dtype))
            kern_args.append(jnp.zeros((1, Cp), jnp.float32).at[0, :C].set(b))
            in_specs.append(pl.BlockSpec((kn * Cp, Cp), lambda n_, i_: (0, 0)))
            in_specs.append(pl.BlockSpec((1, Cp), lambda n_, i_: (0, 0)))
        steps.append(tuple(blk))
        HL = max(HL, L)                          # deepest block's cumulative halo
        HR = max(HR, R)

    # --- time tiling -------------------------------------------------------------------
    T_tile = min(_round_up(T, 8), _round_up(tile_t, 8))
    nT = pl.cdiv(T, T_tile)
    T_grid = nT * T_tile
    HLp = _round_up(HL, 8)                       # sublane-aligned halos
    HRp = _round_up(HR, 8)
    W0 = HLp + T_tile + HRp                      # per-tile window incl. halo

    # --- pad input: NCT -> NTC, halo + grid-tail + channel zero padding (XLA fuses) -----
    x = jnp.transpose(x_nct, (0, 2, 1))          # (N, T, C)
    x = jnp.pad(x, ((0, 0), (HLp, (T_grid - T) + HRp), (0, Cp - C)))

    kernel = _make_mrf_kernel(tuple(steps), T_true=T, T_tile=T_tile, W0=W0, HLp=HLp,
                              Cp=Cp, n_blocks=n_blocks, mxu_dtype=mxu_dtype)

    # VMEM budget: double-buffered weights/biases + x window scratch + output tiles.
    need = 2 * sum(int(a.size) * a.dtype.itemsize for a in kern_args)
    need += 2 * W0 * Cp * 4 + 2 * T_tile * Cp * 4 + (8 << 20)
    vmem_limit = int(max(need, 32 << 20))
    # TODO(synk): for C~512 HiFi-GAN configs with many layers, stream weights per layer
    # (and/or shrink tile_t) to stay under v7x's 64 MiB VMEM instead of keeping all resident.

    out = pl.pallas_call(
        kernel,
        out_shape=jax.ShapeDtypeStruct((N, T_grid, Cp), x_nct.dtype),
        grid_spec=pltpu.PrefetchScalarGridSpec(
            num_scalar_prefetch=0,
            grid=(N, nT),
            in_specs=[pl.BlockSpec(memory_space=pl.ANY)] + in_specs,
            out_specs=pl.BlockSpec((None, T_tile, Cp), lambda n_, i_: (n_, i_, 0)),
            scratch_shapes=[pltpu.VMEM((2, W0, Cp), jnp.float32),
                            pltpu.SemaphoreType.DMA((2,))]),
        compiler_params=pltpu.CompilerParams(
            dimension_semantics=("parallel", "arbitrary"),
            vmem_limit_bytes=vmem_limit),
    )(x, *kern_args)

    # Strip channel / tail padding and return to the PyTorch NCT layout.
    return jnp.transpose(out[:, :T, :C], (0, 2, 1))


def mrf_reference(x, params, k_r, D_r):
    """Literal pure-JAX transcription of the PyTorch forward (NCT layout)."""
    res = None
    for n, kn in enumerate(k_r):
        xb = x
        for m in range(len(D_r[n])):
            y = None
            for l in range(len(D_r[n][m])):      # y overwritten, as in PyTorch
                w, b = params[n][m][l]
                d = D_r[n][m][l]
                a = jnp.where(xb > 0, xb, LRELU_SLOPE * xb)
                pad = d * (kn - 1)
                y = jax.lax.conv_general_dilated(
                    a, w, window_strides=(1,),
                    padding=[(pad // 2, pad - pad // 2)],
                    rhs_dilation=(d,),
                    dimension_numbers=('NCH', 'OIH', 'NCH')) + b[None, :, None]
            xb = xb + y
        res = xb if res is None else res + xb
    return res / len(k_r)


if __name__ == "__main__":
    # Small, module-consistent config; T / tile_t chosen so the time grid has several
    # tiles (exercises the cross-tile halo DMA, prefetch chain and edge masking).
    N, C, T = 2, 8, 96
    k_r = (3, 5)
    D_r = (((1, 2), (2, 1)),     # ResBlock 0: 2 dilation groups of 2 layers each
           ((1, 3), (3, 2)))     # ResBlock 1

    key = jax.random.PRNGKey(0)
    params = []
    for n, kn in enumerate(k_r):
        block = []
        for m in range(len(D_r[n])):
            group = []
            for l in range(len(D_r[n][m])):
                key, kw, kb = jax.random.split(key, 3)
                w = 0.1 * jax.random.normal(kw, (C, C, kn), jnp.float32)  # (Cout, Cin, K)
                b = 0.1 * jax.random.normal(kb, (C,), jnp.float32)
                group.append((w, b))
            block.append(group)
        params.append(block)

    key, kx = jax.random.split(key)
    x = jax.random.normal(kx, (N, C, T), jnp.float32)

    ref = mrf_reference(x, params, k_r, D_r)

    # f32 MXU path (faithful to the module's dtype)
    out = jax.block_until_ready(mrf_pallas(x, params, k_r, D_r, tile_t=32))
    np.testing.assert_allclose(np.asarray(out), np.asarray(ref), atol=2e-3, rtol=2e-3)

    # bf16-weight MXU fast path (v6e/v7x), f32 accumulation — looser tolerance
    out_bf16 = jax.block_until_ready(
        mrf_pallas(x, params, k_r, D_r, tile_t=32, mxu_dtype=jnp.bfloat16))
    np.testing.assert_allclose(np.asarray(out_bf16), np.asarray(ref), atol=5e-2, rtol=5e-2)

    print("KERNEL_OK")
</pallas_src>

<mosaic_0001>
module attributes {stable_mosaic.version = 11 : i64} {
  func.func @kernel(%arg0: i32, %arg1: i32, %arg2: memref<2x128x128xf32, #tpu.memory_space<any>>, %arg3: memref<384x128xf32, #tpu.memory_space<vmem>>, %arg4: memref<1x128xf32, #tpu.memory_space<vmem>>, %arg5: memref<384x128xf32, #tpu.memory_space<vmem>>, %arg6: memref<1x128xf32, #tpu.memory_space<vmem>>, %arg7: memref<640x128xf32, #tpu.memory_space<vmem>>, %arg8: memref<1x128xf32, #tpu.memory_space<vmem>>, %arg9: memref<640x128xf32, #tpu.memory_space<vmem>>, %arg10: memref<1x128xf32, #tpu.memory_space<vmem>>, %arg11: memref<1x32x128xf32, #tpu.memory_space<vmem>>, %arg12: memref<2x64x128xf32, #tpu.memory_space<vmem>>, %arg13: memref<2x!tpu.dma_semaphore, #tpu.memory_space<semaphore_mem>>) attributes {dimension_semantics = [#tpu.dimension_semantics<parallel>, #tpu.dimension_semantics<arbitrary>], iteration_bounds = array<i64: 2, 3>, scalar_prefetch = 0 : i64, scratch_operands = 2 : i64, tpu.core_type = #tpu.core_type<tc>, window_params = [{}, {pipeline_mode = #tpu.pipeline_mode<synchronous>, transform_indices = @transform_1, window_bounds = array<i64: 384, 128>}, {pipeline_mode = #tpu.pipeline_mode<synchronous>, transform_indices = @transform_2, window_bounds = array<i64: 1, 128>}, {pipeline_mode = #tpu.pipeline_mode<synchronous>, transform_indices = @transform_3, window_bounds = array<i64: 384, 128>}, {pipeline_mode = #tpu.pipeline_mode<synchronous>, transform_indices = @transform_4, window_bounds = array<i64: 1, 128>}, {pipeline_mode = #tpu.pipeline_mode<synchronous>, transform_indices = @transform_5, window_bounds = array<i64: 640, 128>}, {pipeline_mode = #tpu.pipeline_mode<synchronous>, transform_indices = @transform_6, window_bounds = array<i64: 1, 128>}, {pipeline_mode = #tpu.pipeline_mode<synchronous>, transform_indices = @transform_7, window_bounds = array<i64: 640, 128>}, {pipeline_mode = #tpu.pipeline_mode<synchronous>, transform_indices = @transform_8, window_bounds = array<i64: 1, 128>}, {transform_indices = @transform_9, window_bounds = array<i64: 1, 32, 128>}]} {
    %c0_i32 = arith.constant 0 : i32
    %0 = arith.cmpi eq, %arg1, %c0_i32 : i32
    %1 = arith.extui %0 : i1 to i32
    %c0_i32_0 = arith.constant 0 : i32
    %2 = arith.cmpi ne, %1, %c0_i32_0 : i32
    scf.if %2 {
      %c0_i32_57 = arith.constant 0 : i32
      %131 = tpu.assume_multiple %c0_i32_57, 8 : i32
      %c0_i32_58 = arith.constant 0 : i32
      %c0_i32_59 = arith.constant 0 : i32
      %c0_i32_60 = arith.constant 0 : i32
      %132 = tpu.memref_slice %arg2[%arg0, %131, %c0_i32_60] : memref<2x128x128xf32, #tpu.memory_space<any>> -> memref<1x64x128xf32, #tpu.memory_space<any>>
      %133 = tpu.memref_squeeze %132 : memref<1x64x128xf32, #tpu.memory_space<any>> -> memref<64x128xf32, #tpu.memory_space<any>>
      %c0_i32_61 = arith.constant 0 : i32
      %c0_i32_62 = arith.constant 0 : i32
      %134 = tpu.memref_slice %arg12[%c0_i32_58, %c0_i32_61, %c0_i32_62] : memref<2x64x128xf32, #tpu.memory_space<vmem>> -> memref<1x64x128xf32, #tpu.memory_space<vmem>>
      %135 = tpu.memref_squeeze %134 : memref<1x64x128xf32, #tpu.memory_space<vmem>> -> memref<64x128xf32, #tpu.memory_space<vmem>>
      %136 = tpu.memref_slice %arg13[%c0_i32_59] : memref<2x!tpu.dma_semaphore, #tpu.memory_space<semaphore_mem>> -> memref<1x!tpu.dma_semaphore, #tpu.memory_space<semaphore_mem>>
      %137 = tpu.memref_squeeze %136 : memref<1x!tpu.dma_semaphore, #tpu.memory_space<semaphore_mem>> -> memref<!tpu.dma_semaphore, #tpu.memory_space<semaphore_mem>>
      tpu.enqueue_dma source(%133 : memref<64x128xf32, #tpu.memory_space<any>>) target(%135 : memref<64x128xf32, #tpu.memory_space<vmem>>) target_semaphore(%137 : memref<!tpu.dma_semaphore, #tpu.memory_space<semaphore_mem>>)
    } else {
    }
    %c2_i32 = arith.constant 2 : i32
    %c0_i32_1 = arith.constant 0 : i32
    %3 = arith.cmpi eq, %c2_i32, %c0_i32_1 : i32
    %c1_i32 = arith.constant 1 : i32
    %4 = arith.select %3, %c1_i32, %c2_i32 : i32
    %5 = arith.remsi %arg1, %4 : i32
    %c0_i32_2 = arith.constant 0 : i32
    %6 = arith.cmpi ne, %5, %c0_i32_2 : i32
    %c0_i32_3 = arith.constant 0 : i32
    %7 = arith.cmpi slt, %5, %c0_i32_3 : i32
    %c0_i32_4 = arith.constant 0 : i32
    %8 = arith.cmpi slt, %4, %c0_i32_4 : i32
    %9 = arith.xori %7, %8 : i1
    %10 = arith.andi %9, %6 : i1
    %11 = arith.addi %5, %4 : i32
    %12 = arith.select %10, %11, %5 : i32
    %c32_i32 = arith.constant 32 : i32
    %13 = arith.muli %arg1, %c32_i32 : i32
    %14 = tpu.assume_multiple %13, 8 : i32
    %c0_i32_5 = arith.constant 0 : i32
    %15 = tpu.memref_slice %arg2[%arg0, %14, %c0_i32_5] : memref<2x128x128xf32, #tpu.memory_space<any>> -> memref<1x64x128xf32, #tpu.memory_space<any>>
    %16 = tpu.memref_squeeze %15 : memref<1x64x128xf32, #tpu.memory_space<any>> -> memref<64x128xf32, #tpu.memory_space<any>>
    %c0_i32_6 = arith.constant 0 : i32
    %c0_i32_7 = arith.constant 0 : i32
    %17 = tpu.memref_slice %arg12[%12, %c0_i32_6, %c0_i32_7] : memref<2x64x128xf32, #tpu.memory_space<vmem>> -> memref<1x64x128xf32, #tpu.memory_space<vmem>>
    %18 = tpu.memref_squeeze %17 : memref<1x64x128xf32, #tpu.memory_space<vmem>> -> memref<64x128xf32, #tpu.memory_space<vmem>>
    %19 = tpu.memref_slice %arg13[%12] : memref<2x!tpu.dma_semaphore, #tpu.memory_space<semaphore_mem>> -> memref<1x!tpu.dma_semaphore, #tpu.memory_space<semaphore_mem>>
    %20 = tpu.memref_squeeze %19 : memref<1x!tpu.dma_semaphore, #tpu.memory_space<semaphore_mem>> -> memref<!tpu.dma_semaphore, #tpu.memory_space<semaphore_mem>>
    tpu.wait_dma2 semaphore(%20 : memref<!tpu.dma_semaphore, #tpu.memory_space<semaphore_mem>>) src(%16 : memref<64x128xf32, #tpu.memory_space<any>>) dst(%18 : memref<64x128xf32, #tpu.memory_space<vmem>>)
    %c1_i32_8 = arith.constant 1 : i32
    %21 = arith.addi %arg1, %c1_i32_8 : i32
    %c3_i32 = arith.constant 3 : i32
    %22 = arith.cmpi slt, %21, %c3_i32 : i32
    %23 = arith.extui %22 : i1 to i32
    %c0_i32_9 = arith.constant 0 : i32
    %24 = arith.cmpi ne, %23, %c0_i32_9 : i32
    scf.if %24 {
      %c1_i32_57 = arith.constant 1 : i32
      %131 = arith.addi %arg1, %c1_i32_57 : i32
      %c1_i32_58 = arith.constant 1 : i32
      %132 = arith.subi %c1_i32_58, %12 : i32
      %c32_i32_59 = arith.constant 32 : i32
      %133 = arith.muli %131, %c32_i32_59 : i32
      %134 = tpu.assume_multiple %133, 8 : i32
      %c0_i32_60 = arith.constant 0 : i32
      %135 = tpu.memref_slice %arg2[%arg0, %134, %c0_i32_60] : memref<2x128x128xf32, #tpu.memory_space<any>> -> memref<1x64x128xf32, #tpu.memory_space<any>>
      %136 = tpu.memref_squeeze %135 : memref<1x64x128xf32, #tpu.memory_space<any>> -> memref<64x128xf32, #tpu.memory_space<any>>
      %c0_i32_61 = arith.constant 0 : i32
      %c0_i32_62 = arith.constant 0 : i32
      %137 = tpu.memref_slice %arg12[%132, %c0_i32_61, %c0_i32_62] : memref<2x64x128xf32, #tpu.memory_space<vmem>> -> memref<1x64x128xf32, #tpu.memory_space<vmem>>
      %138 = tpu.memref_squeeze %137 : memref<1x64x128xf32, #tpu.memory_space<vmem>> -> memref<64x128xf32, #tpu.memory_space<vmem>>
      %139 = tpu.memref_slice %arg13[%132] : memref<2x!tpu.dma_semaphore, #tpu.memory_space<semaphore_mem>> -> memref<1x!tpu.dma_semaphore, #tpu.memory_space<semaphore_mem>>
      %140 = tpu.memref_squeeze %139 : memref<1x!tpu.dma_semaphore, #tpu.memory_space<semaphore_mem>> -> memref<!tpu.dma_semaphore, #tpu.memory_space<semaphore_mem>>
      tpu.enqueue_dma source(%136 : memref<64x128xf32, #tpu.memory_space<any>>) target(%138 : memref<64x128xf32, #tpu.memory_space<vmem>>) target_semaphore(%140 : memref<!tpu.dma_semaphore, #tpu.memory_space<semaphore_mem>>)
    } else {
    }
    %25 = arith.index_cast %12 : i32 to index
    %c0 = arith.constant 0 : index
    %c0_10 = arith.constant 0 : index
    %26 = vector.load %arg12[%25, %c0, %c0_10] : memref<2x64x128xf32, #tpu.memory_space<vmem>>, vector<1x64x128xf32>
    %27 = vector.shape_cast %26 : vector<1x64x128xf32> to vector<64x128xf32>
    %28 = tpu.iota {dimensions = array<i32: 0>} : vector<64x128xi32>
    %c32_i32_11 = arith.constant 32 : i32
    %29 = arith.muli %arg1, %c32_i32_11 : i32
    %c16_i32 = arith.constant 16 : i32
    %30 = arith.subi %29, %c16_i32 : i32
    %31 = vector.broadcast %30 : i32 to vector<64x128xi32>
    %32 = arith.addi %28, %31 : vector<64x128xi32>
    %c0_i32_12 = arith.constant 0 : i32
    %33 = vector.broadcast %c0_i32_12 : i32 to vector<64x128xi32>
    %34 = arith.cmpi sge, %32, %33 : vector<64x128xi32>
    %c96_i32 = arith.constant 96 : i32
    %35 = vector.broadcast %c96_i32 : i32 to vector<64x128xi32>
    %36 = arith.cmpi slt, %32, %35 : vector<64x128xi32>
    %37 = arith.andi %34, %36 : vector<64x128xi1>
    %cst = arith.constant 0.000000e+00 : f32
    %38 = vector.broadcast %cst : f32 to vector<64x128xf32>
    %c0_13 = arith.constant 0 : index
    %c0_14 = arith.constant 0 : index
    %39 = vector.load %arg3[%c0_13, %c0_14] : memref<384x128xf32, #tpu.memory_space<vmem>>, vector<384x128xf32>
    %c0_15 = arith.constant 0 : index
    %c0_16 = arith.constant 0 : index
    %40 = vector.load %arg4[%c0_15, %c0_16] : memref<1x128xf32, #tpu.memory_space<vmem>>, vector<1x128xf32>
    %cst_17 = arith.constant 0.000000e+00 : f32
    %41 = vector.broadcast %cst_17 : f32 to vector<64x128xf32>
    %42 = arith.cmpf ogt, %27, %41 : vector<64x128xf32>
    %cst_18 = arith.constant 1.000000e-01 : f32
    %43 = vector.broadcast %cst_18 : f32 to vector<64x128xf32>
    %44 = arith.mulf %43, %27 : vector<64x128xf32>
    %45 = arith.select %42, %27, %44 : vector<64x128xi1>, vector<64x128xf32>
    %cst_19 = arith.constant 0.000000e+00 : f32
    %46 = vector.broadcast %cst_19 : f32 to vector<64x128xf32>
    %47 = arith.select %37, %45, %46 : vector<64x128xi1>, vector<64x128xf32>
    %cst_20 = arith.constant 0.000000e+00 : f32
    %48 = vector.broadcast %cst_20 : f32 to vector<2x128xf32>
    %cst_21 = arith.constant 0.000000e+00 : f32
    %49 = vector.broadcast %cst_21 : f32 to vector<2x128xf32>
    %50 = tpu.concatenate %48, %47, %49 in 0 : vector<2x128xf32>, vector<64x128xf32>, vector<2x128xf32> -> vector<68x128xf32>
    %51 = vector.extract_strided_slice %50 {offsets = [0, 0], sizes = [64, 128], strides = [1, 1]} : vector<68x128xf32> to vector<64x128xf32>
    %52 = vector.extract_strided_slice %50 {offsets = [2, 0], sizes = [64, 128], strides = [1, 1]} : vector<68x128xf32> to vector<64x128xf32>
    %53 = vector.extract_strided_slice %50 {offsets = [4, 0], sizes = [64, 128], strides = [1, 1]} : vector<68x128xf32> to vector<64x128xf32>
    %54 = tpu.concatenate %51, %52, %53 in 1 : vector<64x128xf32>, vector<64x128xf32>, vector<64x128xf32> -> vector<64x384xf32>
    %cst_22 = arith.constant dense<0.000000e+00> : vector<64x128xf32>
    %55 = tpu.matmul %54, %39, %cst_22 {dimension_numbers = #tpu.dot_dimension_numbers<[1], [0], [0], [1], [0, 0, 1, 1], [], []>} : vector<64x384xf32>, vector<384x128xf32>, vector<64x128xf32> -> vector<64x128xf32>
    %56 = vector.broadcast %40 : vector<1x128xf32> to vector<64x128xf32>
    %57 = arith.addf %55, %56 : vector<64x128xf32>
    %58 = arith.addf %27, %57 : vector<64x128xf32>
    %c0_23 = arith.constant 0 : index
    %c0_24 = arith.constant 0 : index
    %59 = vector.load %arg5[%c0_23, %c0_24] : memref<384x128xf32, #tpu.memory_space<vmem>>, vector<384x128xf32>
    %c0_25 = arith.constant 0 : index
    %c0_26 = arith.constant 0 : index
    %60 = vector.load %arg6[%c0_25, %c0_26] : memref<1x128xf32, #tpu.memory_space<vmem>>, vector<1x128xf32>
    %cst_27 = arith.constant 0.000000e+00 : f32
    %61 = vector.broadcast %cst_27 : f32 to vector<64x128xf32>
    %62 = arith.cmpf ogt, %58, %61 : vector<64x128xf32>
    %cst_28 = arith.constant 1.000000e-01 : f32
    %63 = vector.broadcast %cst_28 : f32 to vector<64x128xf32>
    %64 = arith.mulf %63, %58 : vector<64x128xf32>
    %65 = arith.select %62, %58, %64 : vector<64x128xi1>, vector<64x128xf32>
    %cst_29 = arith.constant 0.000000e+00 : f32
    %66 = vector.broadcast %cst_29 : f32 to vector<64x128xf32>
    %67 = arith.select %37, %65, %66 : vector<64x128xi1>, vector<64x128xf32>
    %cst_30 = arith.constant 0.000000e+00 : f32
    %68 = vector.broadcast %cst_30 : f32 to vector<1x128xf32>
    %cst_31 = arith.constant 0.000000e+00 : f32
    %69 = vector.broadcast %cst_31 : f32 to vector<1x128xf32>
    %70 = tpu.concatenate %68, %67, %69 in 0 : vector<1x128xf32>, vector<64x128xf32>, vector<1x128xf32> -> vector<66x128xf32>
    %71 = vector.extract_strided_slice %70 {offsets = [0, 0], sizes = [64, 128], strides = [1, 1]} : vector<66x128xf32> to vector<64x128xf32>
    %72 = vector.extract_strided_slice %70 {offsets = [1, 0], sizes = [64, 128], strides = [1, 1]} : vector<66x128xf32> to vector<64x128xf32>
    %73 = vector.extract_strided_slice %70 {offsets = [2, 0], sizes = [64, 128], strides = [1, 1]} : vector<66x128xf32> to vector<64x128xf32>
    %74 = tpu.concatenate %71, %72, %73 in 1 : vector<64x128xf32>, vector<64x128xf32>, vector<64x128xf32> -> vector<64x384xf32>
    %cst_32 = arith.constant dense<0.000000e+00> : vector<64x128xf32>
    %75 = tpu.matmul %74, %59, %cst_32 {dimension_numbers = #tpu.dot_dimension_numbers<[1], [0], [0], [1], [0, 0, 1, 1], [], []>} : vector<64x384xf32>, vector<384x128xf32>, vector<64x128xf32> -> vector<64x128xf32>
    %76 = vector.broadcast %60 : vector<1x128xf32> to vector<64x128xf32>
    %77 = arith.addf %75, %76 : vector<64x128xf32>
    %78 = arith.addf %58, %77 : vector<64x128xf32>
    %79 = arith.addf %38, %78 : vector<64x128xf32>
    %c0_33 = arith.constant 0 : index
    %c0_34 = arith.constant 0 : index
    %80 = vector.load %arg7[%c0_33, %c0_34] : memref<640x128xf32, #tpu.memory_space<vmem>>, vector<640x128xf32>
    %c0_35 = arith.constant 0 : index
    %c0_36 = arith.constant 0 : index
    %81 = vector.load %arg8[%c0_35, %c0_36] : memref<1x128xf32, #tpu.memory_space<vmem>>, vector<1x128xf32>
    %cst_37 = arith.constant 0.000000e+00 : f32
    %82 = vector.broadcast %cst_37 : f32 to vector<64x128xf32>
    %83 = arith.cmpf ogt, %27, %82 : vector<64x128xf32>
    %cst_38 = arith.constant 1.000000e-01 : f32
    %84 = vector.broadcast %cst_38 : f32 to vector<64x128xf32>
    %85 = arith.mulf %84, %27 : vector<64x128xf32>
    %86 = arith.select %83, %27, %85 : vector<64x128xi1>, vector<64x128xf32>
    %cst_39 = arith.constant 0.000000e+00 : f32
    %87 = vector.broadcast %cst_39 : f32 to vector<64x128xf32>
    %88 = arith.select %37, %86, %87 : vector<64x128xi1>, vector<64x128xf32>
    %cst_40 = arith.constant 0.000000e+00 : f32
    %89 = vector.broadcast %cst_40 : f32 to vector<6x128xf32>
    %cst_41 = arith.constant 0.000000e+00 : f32
    %90 = vector.broadcast %cst_41 : f32 to vector<6x128xf32>
    %91 = tpu.concatenate %89, %88, %90 in 0 : vector<6x128xf32>, vector<64x128xf32>, vector<6x128xf32> -> vector<76x128xf32>
    %92 = vector.extract_strided_slice %91 {offsets = [0, 0], sizes = [64, 128], strides = [1, 1]} : vector<76x128xf32> to vector<64x128xf32>
    %93 = vector.extract_strided_slice %91 {offsets = [3, 0], sizes = [64, 128], strides = [1, 1]} : vector<76x128xf32> to vector<64x128xf32>
    %94 = vector.extract_strided_slice %91 {offsets = [6, 0], sizes = [64, 128], strides = [1, 1]} : vector<76x128xf32> to vector<64x128xf32>
    %95 = vector.extract_strided_slice %91 {offsets = [9, 0], sizes = [64, 128], strides = [1, 1]} : vector<76x128xf32> to vector<64x128xf32>
    %96 = vector.extract_strided_slice %91 {offsets = [12, 0], sizes = [64, 128], strides = [1, 1]} : vector<76x128xf32> to vector<64x128xf32>
    %97 = tpu.concatenate %92, %93, %94, %95, %96 in 1 : vector<64x128xf32>, vector<64x128xf32>, vector<64x128xf32>, vector<64x128xf32>, vector<64x128xf32> -> vector<64x640xf32>
    %cst_42 = arith.constant dense<0.000000e+00> : vector<64x128xf32>
    %98 = tpu.matmul %97, %80, %cst_42 {dimension_numbers = #tpu.dot_dimension_numbers<[1], [0], [0], [1], [0, 0, 1, 1], [], []>} : vector<64x640xf32>, vector<640x128xf32>, vector<64x128xf32> -> vector<64x128xf32>
    %99 = vector.broadcast %81 : vector<1x128xf32> to vector<64x128xf32>
    %100 = arith.addf %98, %99 : vector<64x128xf32>
    %101 = arith.addf %27, %100 : vector<64x128xf32>
    %c0_43 = arith.constant 0 : index
    %c0_44 = arith.constant 0 : index
    %102 = vector.load %arg9[%c0_43, %c0_44] : memref<640x128xf32, #tpu.memory_space<vmem>>, vector<640x128xf32>
    %c0_45 = arith.constant 0 : index
    %c0_46 = arith.constant 0 : index
    %103 = vector.load %arg10[%c0_45, %c0_46] : memref<1x128xf32, #tpu.memory_space<vmem>>, vector<1x128xf32>
    %cst_47 = arith.constant 0.000000e+00 : f32
    %104 = vector.broadcast %cst_47 : f32 to vector<64x128xf32>
    %105 = arith.cmpf ogt, %101, %104 : vector<64x128xf32>
    %cst_48 = arith.constant 1.000000e-01 : f32
    %106 = vector.broadcast %cst_48 : f32 to vector<64x128xf32>
    %107 = arith.mulf %106, %101 : vector<64x128xf32>
    %108 = arith.select %105, %101, %107 : vector<64x128xi1>, vector<64x128xf32>
    %cst_49 = arith.constant 0.000000e+00 : f32
    %109 = vector.broadcast %cst_49 : f32 to vector<64x128xf32>
    %110 = arith.select %37, %108, %109 : vector<64x128xi1>, vector<64x128xf32>
    %cst_50 = arith.constant 0.000000e+00 : f32
    %111 = vector.broadcast %cst_50 : f32 to vector<4x128xf32>
    %cst_51 = arith.constant 0.000000e+00 : f32
    %112 = vector.broadcast %cst_51 : f32 to vector<4x128xf32>
    %113 = tpu.concatenate %111, %110, %112 in 0 : vector<4x128xf32>, vector<64x128xf32>, vector<4x128xf32> -> vector<72x128xf32>
    %114 = vector.extract_strided_slice %113 {offsets = [0, 0], sizes = [64, 128], strides = [1, 1]} : vector<72x128xf32> to vector<64x128xf32>
    %115 = vector.extract_strided_slice %113 {offsets = [2, 0], sizes = [64, 128], strides = [1, 1]} : vector<72x128xf32> to vector<64x128xf32>
    %116 = vector.extract_strided_slice %113 {offsets = [4, 0], sizes = [64, 128], strides = [1, 1]} : vector<72x128xf32> to vector<64x128xf32>
    %117 = vector.extract_strided_slice %113 {offsets = [6, 0], sizes = [64, 128], strides = [1, 1]} : vector<72x128xf32> to vector<64x128xf32>
    %118 = vector.extract_strided_slice %113 {offsets = [8, 0], sizes = [64, 128], strides = [1, 1]} : vector<72x128xf32> to vector<64x128xf32>
    %119 = tpu.concatenate %114, %115, %116, %117, %118 in 1 : vector<64x128xf32>, vector<64x128xf32>, vector<64x128xf32>, vector<64x128xf32>, vector<64x128xf32> -> vector<64x640xf32>
    %cst_52 = arith.constant dense<0.000000e+00> : vector<64x128xf32>
    %120 = tpu.matmul %119, %102, %cst_52 {dimension_numbers = #tpu.dot_dimension_numbers<[1], [0], [0], [1], [0, 0, 1, 1], [], []>} : vector<64x640xf32>, vector<640x128xf32>, vector<64x128xf32> -> vector<64x128xf32>
    %121 = vector.broadcast %103 : vector<1x128xf32> to vector<64x128xf32>
    %122 = arith.addf %120, %121 : vector<64x128xf32>
    %123 = arith.addf %101, %122 : vector<64x128xf32>
    %124 = arith.addf %79, %123 : vector<64x128xf32>
    %125 = vector.extract_strided_slice %124 {offsets = [16, 0], sizes = [32, 128], strides = [1, 1]} : vector<64x128xf32> to vector<32x128xf32>
    %cst_53 = arith.constant 5.000000e-01 : f32
    %126 = vector.broadcast %cst_53 : f32 to vector<32x128xf32>
    %127 = arith.mulf %125, %126 : vector<32x128xf32>
    %c0_54 = arith.constant 0 : index
    %c0_55 = arith.constant 0 : index
    %c0_56 = arith.constant 0 : index
    %128 = vector.load %arg11[%c0_54, %c0_55, %c0_56] : memref<1x32x128xf32, #tpu.memory_space<vmem>>, vector<1x32x128xf32>
    %129 = vector.shape_cast %128 : vector<1x32x128xf32> to vector<32x128xf32>
    %130 = vector.shape_cast %127 : vector<32x128xf32> to vector<1x32x128xf32>
    tpu.vector_store %arg11[%c0_54, %c0_55, %c0_56], %130 {strides = array<i32>} : memref<1x32x128xf32, #tpu.memory_space<vmem>>, vector<1x32x128xf32>,
    return
  }
  func.func @transform_1(%arg0: i32, %arg1: i32) -> (i32, i32) {
    %c0_i32 = arith.constant 0 : i32
    %c0_i32_0 = arith.constant 0 : i32
    %c0_i32_1 = arith.constant 0 : i32
    return %c0_i32, %c0_i32_0 : i32, i32
  }
  func.func @transform_2(%arg0: i32, %arg1: i32) -> (i32, i32) {
    %c0_i32 = arith.constant 0 : i32
    %c0_i32_0 = arith.constant 0 : i32
    %c0_i32_1 = arith.constant 0 : i32
    return %c0_i32, %c0_i32_0 : i32, i32
  }
  func.func @transform_3(%arg0: i32, %arg1: i32) -> (i32, i32) {
    %c0_i32 = arith.constant 0 : i32
    %c0_i32_0 = arith.constant 0 : i32
    %c0_i32_1 = arith.constant 0 : i32
    return %c0_i32, %c0_i32_0 : i32, i32
  }
  func.func @transform_4(%arg0: i32, %arg1: i32) -> (i32, i32) {
    %c0_i32 = arith.constant 0 : i32
    %c0_i32_0 = arith.constant 0 : i32
    %c0_i32_1 = arith.constant 0 : i32
    return %c0_i32, %c0_i32_0 : i32, i32
  }
  func.func @transform_5(%arg0: i32, %arg1: i32) -> (i32, i32) {
    %c0_i32 = arith.constant 0 : i32
    %c0_i32_0 = arith.constant 0 : i32
    %c0_i32_1 = arith.constant 0 : i32
    return %c0_i32, %c0_i32_0 : i32, i32
  }
  func.func @transform_6(%arg0: i32, %arg1: i32) -> (i32, i32) {
    %c0_i32 = arith.constant 0 : i32
    %c0_i32_0 = arith.constant 0 : i32
    %c0_i32_1 = arith.constant 0 : i32
    return %c0_i32, %c0_i32_0 : i32, i32
  }
  func.func @transform_7(%arg0: i32, %arg1: i32) -> (i32, i32) {
    %c0_i32 = arith.constant 0 : i32
    %c0_i32_0 = arith.constant 0 : i32
    %c0_i32_1 = arith.constant 0 : i32
    return %c0_i32, %c0_i32_0 : i32, i32
  }
  func.func @transform_8(%arg0: i32, %arg1: i32) -> (i32, i32) {
    %c0_i32 = arith.constant 0 : i32
    %c0_i32_0 = arith.constant 0 : i32
    %c0_i32_1 = arith.constant 0 : i32
    return %c0_i32, %c0_i32_0 : i32, i32
  }
  func.func @transform_9(%arg0: i32, %arg1: i32) -> (i32, i32, i32) {
    %c0_i32 = arith.constant 0 : i32
    %c0_i32_0 = arith.constant 0 : i32
    return %arg0, %arg1, %c0_i32 : i32, i32, i32
  }
}

</mosaic_0001>

<llo_original>
// kernel: tpu_custom_call.1
$region0: #{tpu_custom_call.1}
  #allocation0 [shape = 'u32[]', space=smem, size = 0x4, offset = 0x4, fixed_abs, tag = 'smem constant byte address 0x4 - core index']
  #allocation1 [shape = 'u32[144,128]{1,0:T(1,128)}', space=vmem, size = 0x12000, scoped, tag = 'internal scratch']
  #allocation2 [shape = 'f32[2,64,128]{2,1,0:T(8,128)}', space=vmem, size = 0x10000, scoped, tag = 'scratch operand']
  #allocation3 [shape = 's32[2]{0}', space=sflag, size = 0x8, scoped, tag = 'scratch operand']
  #allocation13 [shape = 's32[]', space=sflag, size = 0x4, offset = 0, fixed_abs, tag = 'sflag constant byte address 0x0 - dummy sync flag']
  #allocation14 [shape = 's32[]', space=sflag, size = 0x4, offset = 0, fixed_abs, tag = 'sflag constant byte address 0x0 - dummy sync flag']
  #allocation15 [shape = 'u32[]', space=smem, size = 0x4, offset = 0x44, fixed_abs, tag = 'smem constant byte address 0x44 - assertion arg 0']
  #allocation16 [shape = 'u32[]', space=smem, size = 0x4, offset = 0x48, fixed_abs, tag = 'smem constant byte address 0x48 - assertion arg 1']
  #allocation17 [shape = 's32[]', space=sflag, size = 0x4, offset = 0, fixed_abs, tag = 'sflag constant byte address 0x0 - dummy sync flag']
  #allocation18 [shape = 's32[]', space=sflag, size = 0x4, offset = 0, fixed_abs, tag = 'sflag constant byte address 0x0 - dummy sync flag']
  %s0 = inlined_call_operand.hbm [shape: f32[2,128,128], index: 0, kind: input, shape index: {}]
  %s1 = inlined_call_operand.hbm [shape: f32[384,128], index: 1, kind: input, shape index: {}]
  %s2 = inlined_call_operand.vmem [shape: f32[1,128], index: 2, kind: input, shape index: {}]
  %s3 = inlined_call_operand.hbm [shape: f32[384,128], index: 3, kind: input, shape index: {}]
  %s4 = inlined_call_operand.vmem [shape: f32[1,128], index: 4, kind: input, shape index: {}]
  %s5 = inlined_call_operand.hbm [shape: f32[640,128], index: 5, kind: input, shape index: {}]
  %s6 = inlined_call_operand.vmem [shape: f32[1,128], index: 6, kind: input, shape index: {}]
  %s7 = inlined_call_operand.hbm [shape: f32[640,128], index: 7, kind: input, shape index: {}]
  %s8 = inlined_call_operand.vmem [shape: f32[1,128], index: 8, kind: input, shape index: {}]
  %s9 = inlined_call_operand.hbm [shape: f32[2,96,128], index: 9, kind: output, shape index: {}]
  %s10 = sld [smem:[#allocation0]]
  $region97: #{tpu_custom_call.1} parent=0
    _
  %s12 = ssub.s32 1, %s10
  %s13 = scalar_select 0, %s12, %s10
  $region1: #{tpu_custom_call.1} parent=0
    #allocation4 [shape = 'u8[196608]{0}', space=vmem, size = 0x30000, scoped, tag = 'input window, operand 1, single buffered']
    #allocation5 [shape = 's32[2]{0}', space=sflag, size = 0x8, scoped, tag = 'scoped memory for tpu_custom_call.1']
    #allocation6 [shape = 's32[2]{0}', space=sflag, size = 0x8, scoped, tag = 'scoped memory for tpu_custom_call.1']
    #allocation7 [shape = 'u8[196608]{0}', space=vmem, size = 0x30000, scoped, tag = 'input window, operand 3, single buffered']
    #allocation8 [shape = 's32[1]{0}', space=sflag, size = 0x4, scoped, tag = 'scoped memory for tpu_custom_call.1']
    #allocation9 [shape = 'u8[327680]{0}', space=vmem, size = 0x50000, scoped, tag = 'input window, operand 5, single buffered']
    #allocation10 [shape = 'u8[327680]{0}', space=vmem, size = 0x50000, scoped, tag = 'input window, operand 7, single buffered']
    #allocation11 [shape = 's32[1]{0}', space=sflag, size = 0x4, scoped, tag = 'scoped memory for tpu_custom_call.1']
    #allocation12 [shape = 'u8[32768]{0}', space=vmem, size = 0x8000, scoped, tag = 'output window, operand 0']
    %14 = vsyncpa [#allocation5], 0
    %15 = vsyncpa [#allocation8], 0
    %16 = vsyncpa [#allocation11], 0
    %17 = vsyncpa [#allocation6], 0
    %s18 = scalar_lea.sflag [#allocation6], 1
    %19 = vsyncpa %s18, 0
    loop: start=0, step=1, limit=8
    $region2: #{tpu_custom_call.1} parent=1 // loop_pre_header
      _
    $region3: #{tpu_custom_call.1} parent=1 // loop_header
      %s21 = sphi 0, %s25
      %p22 = scmp.ge.s32.totalorder %s21, 8
      %s28 = sphi 0, %s40
      %s29 = sphi 0, %s36
      %s30 = sphi 0, %s28
      %s31 = sphi 0, %s29
      %s32 = sphi 0, %s30
      %s33 = sphi 0, %s31
      %s41 = sphi 0, %s41
      %s43 = sphi 0, %s41
      %s44 = sphi 0, %s43
      %s58 = sphi 0, %s44
      %s62 = sphi 0, %s62
      %s64 = sphi 0, %s62
      %s65 = sphi 0, %s64
      %s79 = sphi 0, %s65
      %s83 = sphi 0, %s83
      %s85 = sphi 0, %s83
      %s86 = sphi 0, %s85
      %s100 = sphi 0, %s86
      %s104 = sphi 0, %s104
      %s106 = sphi 0, %s104
      %s107 = sphi 0, %s106
      %s121 = sphi 0, %s107
      %s125 = sphi 0, %s125
      %s127 = sphi 0, %s125
      %s128 = sphi 0, %s127
      %s142 = sphi 0, %s128
      %s146 = sphi 0, %s146
      %s148 = sphi 0, %s146
      %s149 = sphi 0, %s148
      %s163 = sphi 0, %s149
      %s167 = sphi 0, %s167
      %s169 = sphi 0, %s167
      %s170 = sphi 0, %s169
      %s184 = sphi 0, %s170
      %s188 = sphi 0, %s188
      %s190 = sphi 0, %s188
      %s191 = sphi 0, %s190
      %s205 = sphi 0, %s191
      %s213 = sphi 0, %s215
      %s216 = sphi 0, %s213
      %s217 = sphi 0, %s216
      %s233 = sphi 0, %s217
    $region4: #{tpu_custom_call.1} parent=1 // loop_header_branch
      %24 = sbr.rel (%p22) target = $region8
    $region5: #{tpu_custom_call.1} parent=1 // loop_body
      %s26 = ssub.s32 %s21, 1
      %s27 = ssub.s32 %s21, 2
      %s34 = sadd.s32 1, %s29
      %p35 = scmp.ge.s32.totalorder %s34, 3
      %s36 = scalar_select %p35, 0, %s34
      %s37 = sadd.s32 1, %s28
      %s38 = scalar_select %p35, %s37, %s28
      %p39 = scmp.ge.s32.totalorder %s38, 2
      %s40 = scalar_select %p39, 0, %s38
      %s42 = sadd.s32 %s41, 1
      %p45 = scmp.eq.s32.totalorder %s21, 5
      %p46 = scmp.ne.s32.totalorder %s41, %s43
      %p47 = scmp.eq.s32.totalorder %s21, 0
      %p48 = por %p46, %p47
      %p49 = scmp.ne.s32.totalorder %s41, %s43
      %p50 = scmp.eq.s32.totalorder %s26, 5
      %p51 = por %p49, %p50
      %p52 = scmp.ne.s32.totalorder %s43, %s44
      %p53 = scmp.eq.s32.totalorder %s26, 0
      %p54 = por %p52, %p53
      %p55 = scmp.ne.s32.totalorder %s43, %s44
      %p56 = scmp.eq.s32.totalorder %s27, 5
      %p57 = por %p55, %p56
      %p59 = scmp.ne.s32.totalorder %s44, %s58
      %p60 = scmp.eq.s32.totalorder %s27, 0
      %p61 = por %p59, %p60
      %s63 = sadd.s32 %s62, 1
      %p66 = scmp.eq.s32.totalorder %s21, 5
      %p67 = scmp.ne.s32.totalorder %s62, %s64
      %p68 = scmp.eq.s32.totalorder %s21, 0
      %p69 = por %p67, %p68
      %p70 = scmp.ne.s32.totalorder %s62, %s64
      %p71 = scmp.eq.s32.totalorder %s26, 5
      %p72 = por %p70, %p71
      %p73 = scmp.ne.s32.totalorder %s64, %s65
      %p74 = scmp.eq.s32.totalorder %s26, 0
      %p75 = por %p73, %p74
      %p76 = scmp.ne.s32.totalorder %s64, %s65
      %p77 = scmp.eq.s32.totalorder %s27, 5
      %p78 = por %p76, %p77
      %p80 = scmp.ne.s32.totalorder %s65, %s79
      %p81 = scmp.eq.s32.totalorder %s27, 0
      %p82 = por %p80, %p81
      %s84 = sadd.s32 %s83, 1
      %p87 = scmp.eq.s32.totalorder %s21, 5
      %p88 = scmp.ne.s32.totalorder %s83, %s85
      %p89 = scmp.eq.s32.totalorder %s21, 0
      %p90 = por %p88, %p89
      %p91 = scmp.ne.s32.totalorder %s83, %s85
      %p92 = scmp.eq.s32.totalorder %s26, 5
      %p93 = por %p91, %p92
      %p94 = scmp.ne.s32.totalorder %s85, %s86
      %p95 = scmp.eq.s32.totalorder %s26, 0
      %p96 = por %p94, %p95
      %p97 = scmp.ne.s32.totalorder %s85, %s86
      %p98 = scmp.eq.s32.totalorder %s27, 5
      %p99 = por %p97, %p98
      %p101 = scmp.ne.s32.totalorder %s86, %s100
      %p102 = scmp.eq.s32.totalorder %s27, 0
      %p103 = por %p101, %p102
      %s105 = sadd.s32 %s104, 1
      %p108 = scmp.eq.s32.totalorder %s21, 5
      %p109 = scmp.ne.s32.totalorder %s104, %s106
      %p110 = scmp.eq.s32.totalorder %s21, 0
      %p111 = por %p109, %p110
      %p112 = scmp.ne.s32.totalorder %s104, %s106
      %p113 = scmp.eq.s32.totalorder %s26, 5
      %p114 = por %p112, %p113
      %p115 = scmp.ne.s32.totalorder %s106, %s107
      %p116 = scmp.eq.s32.totalorder %s26, 0
      %p117 = por %p115, %p116
      %p118 = scmp.ne.s32.totalorder %s106, %s107
      %p119 = scmp.eq.s32.totalorder %s27, 5
      %p120 = por %p118, %p119
      %p122 = scmp.ne.s32.totalorder %s107, %s121
      %p123 = scmp.eq.s32.totalorder %s27, 0
      %p124 = por %p122, %p123
      %s126 = sadd.s32 %s125, 1
      %p129 = scmp.eq.s32.totalorder %s21, 5
      %p130 = scmp.ne.s32.totalorder %s125, %s127
      %p131 = scmp.eq.s32.totalorder %s21, 0
      %p132 = por %p130, %p131
      %p133 = scmp.ne.s32.totalorder %s125, %s127
      %p134 = scmp.eq.s32.totalorder %s26, 5
      %p135 = por %p133, %p134
      %p136 = scmp.ne.s32.totalorder %s127, %s128
      %p137 = scmp.eq.s32.totalorder %s26, 0
      %p138 = por %p136, %p137
      %p139 = scmp.ne.s32.totalorder %s127, %s128
      %p140 = scmp.eq.s32.totalorder %s27, 5
      %p141 = por %p139, %p140
      %p143 = scmp.ne.s32.totalorder %s128, %s142
      %p144 = scmp.eq.s32.totalorder %s27, 0
      %p145 = por %p143, %p144
      %s147 = sadd.s32 %s146, 1
      %p150 = scmp.eq.s32.totalorder %s21, 5
      %p151 = scmp.ne.s32.totalorder %s146, %s148
      %p152 = scmp.eq.s32.totalorder %s21, 0
      %p153 = por %p151, %p152
      %p154 = scmp.ne.s32.totalorder %s146, %s148
      %p155 = scmp.eq.s32.totalorder %s26, 5
      %p156 = por %p154, %p155
      %p157 = scmp.ne.s32.totalorder %s148, %s149
      %p158 = scmp.eq.s32.totalorder %s26, 0
      %p159 = por %p157, %p158
      %p160 = scmp.ne.s32.totalorder %s148, %s149
      %p161 = scmp.eq.s32.totalorder %s27, 5
      %p162 = por %p160, %p161
      %p164 = scmp.ne.s32.totalorder %s149, %s163
      %p165 = scmp.eq.s32.totalorder %s27, 0
      %p166 = por %p164, %p165
      %s168 = sadd.s32 %s167, 1
      %p171 = scmp.eq.s32.totalorder %s21, 5
      %p172 = scmp.ne.s32.totalorder %s167, %s169
      %p173 = scmp.eq.s32.totalorder %s21, 0
      %p174 = por %p172, %p173
      %p175 = scmp.ne.s32.totalorder %s167, %s169
      %p176 = scmp.eq.s32.totalorder %s26, 5
      %p177 = por %p175, %p176
      %p178 = scmp.ne.s32.totalorder %s169, %s170
      %p179 = scmp.eq.s32.totalorder %s26, 0
      %p180 = por %p178, %p179
      %p181 = scmp.ne.s32.totalorder %s169, %s170
      %p182 = scmp.eq.s32.totalorder %s27, 5
      %p183 = por %p181, %p182
      %p185 = scmp.ne.s32.totalorder %s170, %s184
      %p186 = scmp.eq.s32.totalorder %s27, 0
      %p187 = por %p185, %p186
      %s189 = sadd.s32 %s188, 1
      %p192 = scmp.eq.s32.totalorder %s21, 5
      %p193 = scmp.ne.s32.totalorder %s188, %s190
      %p194 = scmp.eq.s32.totalorder %s21, 0
      %p195 = por %p193, %p194
      %p196 = scmp.ne.s32.totalorder %s188, %s190
      %p197 = scmp.eq.s32.totalorder %s26, 5
      %p198 = por %p196, %p197
      %p199 = scmp.ne.s32.totalorder %s190, %s191
      %p200 = scmp.eq.s32.totalorder %s26, 0
      %p201 = por %p199, %p200
      %p202 = scmp.ne.s32.totalorder %s190, %s191
      %p203 = scmp.eq.s32.totalorder %s27, 5
      %p204 = por %p202, %p203
      %p206 = scmp.ne.s32.totalorder %s191, %s205
      %p207 = scmp.eq.s32.totalorder %s27, 0
      %p208 = por %p206, %p207
      %s209 = ssub.s32 %s28, %s40
      %s210 = ssub.s32 %s29, %s36
      %s211 = sor.u32 %s209, %s210
      %p212 = scmp.eq.s32.totalorder %s211, 0
      %s214 = sadd.s32 %s213, 1
      %s215 = scalar_select %p212, %s213, %s214
      %p218 = pneg %p212
      %p219 = scmp.eq.s32.totalorder %s21, 5
      %p220 = por %p218, %p219
      %p221 = scmp.ne.s32.totalorder %s213, %s216
      %p222 = scmp.eq.s32.totalorder %s21, 0
      %p223 = por %p221, %p222
      %p224 = scmp.ne.s32.totalorder %s213, %s216
      %p225 = scmp.eq.s32.totalorder %s26, 5
      %p226 = por %p224, %p225
      %p227 = scmp.ne.s32.totalorder %s216, %s217
      %p228 = scmp.eq.s32.totalorder %s26, 0
      %p229 = por %p227, %p228
      %p230 = scmp.ne.s32.totalorder %s216, %s217
      %p231 = scmp.eq.s32.totalorder %s27, 5
      %p232 = por %p230, %p231
      %p234 = scmp.ne.s32.totalorder %s217, %s233
      %p235 = scmp.eq.s32.totalorder %s27, 0
      %p236 = por %p234, %p235
      %p237 = scmp.le.s32.totalorder 1, %s21
      %p238 = scmp.lt.s32.totalorder %s21, 7
      %p239 = pnand %p237, %p238
      %p240 = pneg %p239
      // Predicated region
      $region9: #{tpu_custom_call.1} parent=5 // pred_check
        _
      $region10: #{tpu_custom_call.1} parent=5 // pred_check_branch
        %242 = sbr.rel (%p239) target = $region12
      $region11: #{tpu_custom_call.1} parent=5 // pred_region
        %s243 = ssub.s32 %s21, 1
        // Predicated region
        $region13: #{tpu_custom_call.1} parent=11 // pred_check
          %p244 = pneg %p54
        $region14: #{tpu_custom_call.1} parent=11 // pred_check_branch
          %246 = sbr.rel (%p244) target = $region16
        $region15: #{tpu_custom_call.1} parent=11 // pred_region
          %s248 = ssub.s32 6144, 6144
          %249 = vsyncadd [#allocation5], %s248
          %s250 = sshll.u32 [#allocation4], 4
          %s251 = int_to_ptr.vmem [resolvable:$true] %s250
          %256 = dma.hbm_to_vmem [thread:$0]  %s1, 6144, %s251, [#allocation5], 128, 128, 8
        $region16: #{tpu_custom_call.1} parent=11 // pred_fallthru
          _
        // Predicated region
        $region17: #{tpu_custom_call.1} parent=11 // pred_check
          %p257 = pneg %p75
        $region18: #{tpu_custom_call.1} parent=11 // pred_check_branch
          %259 = sbr.rel (%p257) target = $region20
        $region19: #{tpu_custom_call.1} parent=11 // pred_region
          _
        $region20: #{tpu_custom_call.1} parent=11 // pred_fallthru
          _
        // Predicated region
        $region21: #{tpu_custom_call.1} parent=11 // pred_check
          %p260 = pneg %p96
        $region22: #{tpu_custom_call.1} parent=11 // pred_check_branch
          %262 = sbr.rel (%p260) target = $region24
        $region23: #{tpu_custom_call.1} parent=11 // pred_region
          %s264 = ssub.s32 6144, 6144
          %265 = vsyncadd [#allocation8], %s264
          %s266 = sshll.u32 [#allocation7], 4
          %s267 = int_to_ptr.vmem [resolvable:$true] %s266
          %272 = dma.hbm_to_vmem [thread:$0]  %s3, 6144, %s267, [#allocation8], 128, 128, 8
        $region24: #{tpu_custom_call.1} parent=11 // pred_fallthru
          _
        // Predicated region
        $region25: #{tpu_custom_call.1} parent=11 // pred_check
          %p273 = pneg %p117
        $region26: #{tpu_custom_call.1} parent=11 // pred_check_branch
          %275 = sbr.rel (%p273) target = $region28
        $region27: #{tpu_custom_call.1} parent=11 // pred_region
          _
        $region28: #{tpu_custom_call.1} parent=11 // pred_fallthru
          _
        // Predicated region
        $region29: #{tpu_custom_call.1} parent=11 // pred_check
          %p276 = pneg %p138
        $region30: #{tpu_custom_call.1} parent=11 // pred_check_branch
          %278 = sbr.rel (%p276) target = $region32
        $region31: #{tpu_custom_call.1} parent=11 // pred_region
          %s280 = ssub.s32 10240, 10240
          %281 = vsyncadd [#allocation8], %s280
          %s282 = sshll.u32 [#allocation9], 4
          %s283 = int_to_ptr.vmem [resolvable:$true] %s282
          %288 = dma.hbm_to_vmem [thread:$0]  %s5, 10240, %s283, [#allocation8], 128, 128, 8
        $region32: #{tpu_custom_call.1} parent=11 // pred_fallthru
          _
        // Predicated region
        $region33: #{tpu_custom_call.1} parent=11 // pred_check
          %p289 = pneg %p159
        $region34: #{tpu_custom_call.1} parent=11 // pred_check_branch
          %291 = sbr.rel (%p289) target = $region36
        $region35: #{tpu_custom_call.1} parent=11 // pred_region
          _
        $region36: #{tpu_custom_call.1} parent=11 // pred_fallthru
          _
        // Predicated region
        $region37: #{tpu_custom_call.1} parent=11 // pred_check
          %p292 = pneg %p180
        $region38: #{tpu_custom_call.1} parent=11 // pred_check_branch
          %294 = sbr.rel (%p292) target = $region40
        $region39: #{tpu_custom_call.1} parent=11 // pred_region
          %s296 = ssub.s32 10240, 10240
          %297 = vsyncadd [#allocation11], %s296
          %s298 = sshll.u32 [#allocation10], 4
          %s299 = int_to_ptr.vmem [resolvable:$true] %s298
          %304 = dma.hbm_to_vmem [thread:$0]  %s7, 10240, %s299, [#allocation11], 128, 128, 8
        $region40: #{tpu_custom_call.1} parent=11 // pred_fallthru
          _
        // Predicated region
        $region41: #{tpu_custom_call.1} parent=11 // pred_check
          %p305 = pneg %p201
        $region42: #{tpu_custom_call.1} parent=11 // pred_check_branch
          %307 = sbr.rel (%p305) target = $region44
        $region43: #{tpu_custom_call.1} parent=11 // pred_region
          _
        $region44: #{tpu_custom_call.1} parent=11 // pred_fallthru
          _
      $region12: #{tpu_custom_call.1} parent=5 // pred_fallthru
        _
      %p308 = scmp.lt.s32.totalorder %s21, 6
      // Predicated region
      $region45: #{tpu_custom_call.1} parent=5 // pred_check
        %p309 = pneg %p308
      $region46: #{tpu_custom_call.1} parent=5 // pred_check_branch
        %311 = sbr.rel (%p309) target = $region48
      $region47: #{tpu_custom_call.1} parent=5 // pred_region
        _
      $region48: #{tpu_custom_call.1} parent=5 // pred_fallthru
        _
      %p312 = scmp.le.s32.totalorder 1, %s21
      %p313 = scmp.lt.s32.totalorder %s21, 7
      %p314 = pnand %p312, %p313
      %p315 = pneg %p314
      // Predicated region
      $region49: #{tpu_custom_call.1} parent=5 // pred_check
        _
      $region50: #{tpu_custom_call.1} parent=5 // pred_check_branch
        %317 = sbr.rel (%p314) target = $region52
      $region51: #{tpu_custom_call.1} parent=5 // pred_region
        %s318 = ssub.s32 %s21, 1
        // Predicated region
        $region53: #{tpu_custom_call.1} parent=51 // pred_check
          %p319 = pneg %p54
        $region54: #{tpu_custom_call.1} parent=51 // pred_check_branch
          %321 = sbr.rel (%p319) target = $region56
        $region55: #{tpu_custom_call.1} parent=51 // pred_region
          %322 = dma.done [#allocation5], 6144
        $region56: #{tpu_custom_call.1} parent=51 // pred_fallthru
          _
        // Predicated region
        $region57: #{tpu_custom_call.1} parent=51 // pred_check
          %p323 = pneg %p96
        $region58: #{tpu_custom_call.1} parent=51 // pred_check_branch
          %325 = sbr.rel (%p323) target = $region60
        $region59: #{tpu_custom_call.1} parent=51 // pred_region
          %326 = dma.done [#allocation8], 6144
        $region60: #{tpu_custom_call.1} parent=51 // pred_fallthru
          _
        // Predicated region
        $region61: #{tpu_custom_call.1} parent=51 // pred_check
          %p327 = pneg %p138
        $region62: #{tpu_custom_call.1} parent=51 // pred_check_branch
          %329 = sbr.rel (%p327) target = $region64
        $region63: #{tpu_custom_call.1} parent=51 // pred_region
          %330 = dma.done [#allocation8], 10240
        $region64: #{tpu_custom_call.1} parent=51 // pred_fallthru
          _
        // Predicated region
        $region65: #{tpu_custom_call.1} parent=51 // pred_check
          %p331 = pneg %p180
        $region66: #{tpu_custom_call.1} parent=51 // pred_check_branch
          %333 = sbr.rel (%p331) target = $region68
        $region67: #{tpu_custom_call.1} parent=51 // pred_region
          %334 = dma.done [#allocation11], 10240
        $region68: #{tpu_custom_call.1} parent=51 // pred_fallthru
          _
        %p335 = pneg %p54
        %p336 = pneg %p51
        %p337 = pneg %p75
        %p338 = pneg %p72
        %p339 = pneg %p96
        %p340 = pneg %p93
        %p341 = pneg %p117
        %p342 = pneg %p114
        %p343 = pneg %p138
        %p344 = pneg %p135
        %p345 = pneg %p159
        %p346 = pneg %p156
        %p347 = pneg %p180
        %p348 = pneg %p177
        %p349 = pneg %p201
        %p350 = pneg %p198
        %p351 = pneg %p229
        %p352 = pneg %p226
        %s353 = sand.u32 %s216, 1
        %s354 = scalar_lea.sflag [#allocation6], %s353
        %s355 = sand.u32 %s216, 1
        %s356 = smul.addr %s355, 32
        %s357 = scalar_lea.vmem [#allocation12], %s356
        %s358 = smul.u32 4, %s31
        %p359 = scmp.eq.s32.totalorder %s31, 0
        // Predicated region
        $region69: #{tpu_custom_call.1} parent=51 // pred_check
          %p360 = pneg %p359
        $region70: #{tpu_custom_call.1} parent=51 // pred_check_branch
          %362 = sbr.rel (%p360) target = $region72
        $region71: #{tpu_custom_call.1} parent=51 // pred_region
          %s363 = smul.u32 %s30, 128
          %s364 = sadd.s32 0, %s363
          %s365 = smul.addr %s364, 16
          %s366 = scalar_lea.hbm %s0, %s365
          // Predicated region
          $region73: #{tpu_custom_call.1} parent=71 // pred_check
            _
          $region74: #{tpu_custom_call.1} parent=71 // pred_check_branch
            %368 = sbr.rel target = $region76
          $region75: #{tpu_custom_call.1} parent=71 // pred_region
            %369 = sst [smem:[#allocation15]] [#allocation14]
            %370 = sst [smem:[#allocation16]] [#allocation13]
          $region76: #{tpu_custom_call.1} parent=71 // pred_fallthru
            _
          %372 = shalt.err (0)
          %s374 = sshll.u32 [#allocation2], 4
          %s375 = int_to_ptr.vmem [resolvable:$true] %s374
          %377 = dma.hbm_to_vmem [thread:$0]  %s366, 1024, %s375, [#allocation3]
        $region72: #{tpu_custom_call.1} parent=51 // pred_fallthru
          _
        %p378 = scmp.lt.s32.totalorder %s31, 0
        %s379 = ssub.s32 0, %s31
        %s380 = scalar_select %p378, %s379, %s31
        %s381 = sand.u32 %s380, 1
        %s382 = ssub.s32 0, %s381
        %s383 = scalar_select %p378, %s382, %s381
        %p384 = scmp.ne.s32.totalorder %s383, 0
        %p385 = scmp.lt.s32.totalorder %s383, 0
        %p386 = pnand %p385, %p384
        %p387 = pneg %p386
        %s388 = sadd.s32 %s383, 2
        %s389 = scalar_select %p387, %s388, %s383
        %s390 = smul.u32 %s31, 32
        %s391 = smul.u32 %s389, 64
        %s392 = scalar_lea.vmem [#allocation2], %s391
        %s393 = scalar_lea.sflag [#allocation3], %s389
        %s394 = smul.u32 64, 1
        %s395 = sshll.u32 %s394, 4
        %396 = dma.done %s393, %s395
        %s397 = sadd.s32 %s31, 1
        %p398 = scmp.lt.s32.totalorder %s397, 3
        // Predicated region
        $region77: #{tpu_custom_call.1} parent=51 // pred_check
          %p399 = pneg %p398
        $region78: #{tpu_custom_call.1} parent=51 // pred_check_branch
          %401 = sbr.rel (%p399) target = $region80
        $region79: #{tpu_custom_call.1} parent=51 // pred_region
          %s402 = ssub.s32 1, %s389
          %s403 = smul.u32 %s397, 32
          %s404 = smul.u32 %s30, 128
          %s405 = sadd.s32 %s403, %s404
          %s406 = smul.addr %s405, 16
          %s407 = scalar_lea.hbm %s0, %s406
          %s408 = smul.u32 %s402, 64
          %s409 = scalar_lea.vmem [#allocation2], %s408
          %s410 = scalar_lea.sflag [#allocation3], %s402
          // Predicated region
          $region81: #{tpu_custom_call.1} parent=79 // pred_check
            _
          $region82: #{tpu_custom_call.1} parent=79 // pred_check_branch
            %412 = sbr.rel target = $region84
          $region83: #{tpu_custom_call.1} parent=79 // pred_region
            %413 = sst [smem:[#allocation15]] [#allocation18]
            %414 = sst [smem:[#allocation16]] [#allocation17]
          $region84: #{tpu_custom_call.1} parent=79 // pred_fallthru
            _
          %416 = shalt.err (0)
          %s418 = sshll.u32 %s409, 4
          %s419 = int_to_ptr.vmem [resolvable:$true] %s418
          %421 = dma.hbm_to_vmem [thread:$0]  %s407, 1024, %s419, %s410
        $region80: #{tpu_custom_call.1} parent=51 // pred_fallthru
          _
        %v422 = vld [vmem:[%s392] sm:$0xff]
        %v423 = vld [vmem:[%s392 + $0x8] sm:$0xff]
        %v424 = vld [vmem:[%s392 + $0x10] sm:$0xff]
        %v425 = vld [vmem:[%s392 + $0x18] sm:$0xff]
        %v426 = vld [vmem:[%s392 + $0x20] sm:$0xff]
        %v427 = vld [vmem:[%s392 + $0x28] sm:$0xff]
        %v428 = vld [vmem:[%s392 + $0x30] sm:$0xff]
        %v429 = vld [vmem:[%s392 + $0x38] sm:$0xff]
        %v430 = vlaneseq
        %v431 = vshrl.u32 %v430, 7
        %v432 = vadd.s32 %v431, 8
        %v433 = vadd.s32 %v431, 16
        %v434 = vadd.s32 %v431, 24
        %v435 = vadd.s32 %v431, 32
        %v436 = vadd.s32 %v431, 40
        %v437 = vadd.s32 %v431, 48
        %v438 = vadd.s32 %v431, 56
        %s439 = ssub.s32 %s390, 16
        %v440 = vstv %s439
        %v441 = vadd.s32 %v431, %v440
        %v442 = vadd.s32 %v432, %v440
        %v443 = vadd.s32 %v433, %v440
        %v444 = vadd.s32 %v434, %v440
        %v445 = vadd.s32 %v435, %v440
        %v446 = vadd.s32 %v436, %v440
        %v447 = vadd.s32 %v437, %v440
        %v448 = vadd.s32 %v438, %v440
        %vm449 = vcmp.ge.s32.totalorder %v441, 0
        %vm450 = vcmp.ge.s32.totalorder %v442, 0
        %vm451 = vcmp.ge.s32.totalorder %v443, 0
        %vm452 = vcmp.ge.s32.totalorder %v444, 0
        %vm453 = vcmp.ge.s32.totalorder %v445, 0
        %vm454 = vcmp.ge.s32.totalorder %v446, 0
        %vm455 = vcmp.ge.s32.totalorder %v447, 0
        %vm456 = vcmp.ge.s32.totalorder %v448, 0
        %vm457 = vcmp.lt.s32.totalorder %v441, 96
        %vm458 = vcmp.lt.s32.totalorder %v442, 96
        %vm459 = vcmp.lt.s32.totalorder %v443, 96
        %vm460 = vcmp.lt.s32.totalorder %v444, 96
        %vm461 = vcmp.lt.s32.totalorder %v445, 96
        %vm462 = vcmp.lt.s32.totalorder %v446, 96
        %vm463 = vcmp.lt.s32.totalorder %v447, 96
        %vm464 = vcmp.lt.s32.totalorder %v448, 96
        %vm465 = vmand %vm449, %vm457
        %vm466 = vmand %vm450, %vm458
        %vm467 = vmand %vm451, %vm459
        %vm468 = vmand %vm452, %vm460
        %vm469 = vmand %vm453, %vm461
        %vm470 = vmand %vm454, %vm462
        %vm471 = vmand %vm455, %vm463
        %vm472 = vmand %vm456, %vm464
        %v473 = vld [vmem:[#allocation4] sm:$0xff]
        %v474 = vld [vmem:[#allocation4 + $0x8] sm:$0xff]
        %v475 = vld [vmem:[#allocation4 + $0x10] sm:$0xff]
        %v476 = vld [vmem:[#allocation4 + $0x18] sm:$0xff]
        %v477 = vld [vmem:[#allocation4 + $0x20] sm:$0xff]
        %v478 = vld [vmem:[#allocation4 + $0x28] sm:$0xff]
        %v479 = vld [vmem:[#allocation4 + $0x30] sm:$0xff]
        %v480 = vld [vmem:[#allocation4 + $0x38] sm:$0xff]
        %v481 = vld [vmem:[#allocation4 + $0x40] sm:$0xff]
        %v482 = vld [vmem:[#allocation4 + $0x48] sm:$0xff]
        %v483 = vld [vmem:[#allocation4 + $0x50] sm:$0xff]
        %v484 = vld [vmem:[#allocation4 + $0x58] sm:$0xff]
        %v485 = vld [vmem:[#allocation4 + $0x60] sm:$0xff]
        %v486 = vld [vmem:[#allocation4 + $0x68] sm:$0xff]
        %v487 = vld [vmem:[#allocation4 + $0x70] sm:$0xff]
        %v488 = vld [vmem:[#allocation4 + $0x78] sm:$0xff]
        %v489 = vld [vmem:[#allocation4 + $0x80] sm:$0xff]
        %v490 = vld [vmem:[#allocation4 + $0x88] sm:$0xff]
        %v491 = vld [vmem:[#allocation4 + $0x90] sm:$0xff]
        %v492 = vld [vmem:[#allocation4 + $0x98] sm:$0xff]
        %v493 = vld [vmem:[#allocation4 + $0xa0] sm:$0xff]
        %v494 = vld [vmem:[#allocation4 + $0xa8] sm:$0xff]
        %v495 = vld [vmem:[#allocation4 + $0xb0] sm:$0xff]
        %v496 = vld [vmem:[#allocation4 + $0xb8] sm:$0xff]
        %v497 = vld [vmem:[#allocation4 + $0xc0] sm:$0xff]
        %v498 = vld [vmem:[#allocation4 + $0xc8] sm:$0xff]
        %v499 = vld [vmem:[#allocation4 + $0xd0] sm:$0xff]
        %v500 = vld [vmem:[#allocation4 + $0xd8] sm:$0xff]
        %v501 = vld [vmem:[#allocation4 + $0xe0] sm:$0xff]
        %v502 = vld [vmem:[#allocation4 + $0xe8] sm:$0xff]
        %v503 = vld [vmem:[#allocation4 + $0xf0] sm:$0xff]
        %v504 = vld [vmem:[#allocation4 + $0xf8] sm:$0xff]
        %v505 = vld [vmem:[#allocation4 + $0x100] sm:$0xff]
        %v506 = vld [vmem:[#allocation4 + $0x108] sm:$0xff]
        %v507 = vld [vmem:[#allocation4 + $0x110] sm:$0xff]
        %v508 = vld [vmem:[#allocation4 + $0x118] sm:$0xff]
        %v509 = vld [vmem:[#allocation4 + $0x120] sm:$0xff]
        %v510 = vld [vmem:[#allocation4 + $0x128] sm:$0xff]
        %v511 = vld [vmem:[#allocation4 + $0x130] sm:$0xff]
        %v512 = vld [vmem:[#allocation4 + $0x138] sm:$0xff]
        %v513 = vld [vmem:[#allocation4 + $0x140] sm:$0xff]
        %v514 = vld [vmem:[#allocation4 + $0x148] sm:$0xff]
        %v515 = vld [vmem:[#allocation4 + $0x150] sm:$0xff]
        %v516 = vld [vmem:[#allocation4 + $0x158] sm:$0xff]
        %v517 = vld [vmem:[#allocation4 + $0x160] sm:$0xff]
        %v518 = vld [vmem:[#allocation4 + $0x168] sm:$0xff]
        %v519 = vld [vmem:[#allocation4 + $0x170] sm:$0xff]
        %v520 = vld [vmem:[#allocation4 + $0x178] sm:$0xff]
        %v521 = vld [vmem:[%s2] sm:$0x1]
        %vm522 = vcmp.gt.f32.partialorder %v422, 0.0
        %vm523 = vcmp.gt.f32.partialorder %v423, 0.0
        %vm524 = vcmp.gt.f32.partialorder %v424, 0.0
        %vm525 = vcmp.gt.f32.partialorder %v425, 0.0
        %vm526 = vcmp.gt.f32.partialorder %v426, 0.0
        %vm527 = vcmp.gt.f32.partialorder %v427, 0.0
        %vm528 = vcmp.gt.f32.partialorder %v428, 0.0
        %vm529 = vcmp.gt.f32.partialorder %v429, 0.0
        %v530 = vmul.f32 %v422, 0.1
        %v531 = vmul.f32 %v423, 0.1
        %v532 = vmul.f32 %v424, 0.1
        %v533 = vmul.f32 %v425, 0.1
        %v534 = vmul.f32 %v426, 0.1
        %v535 = vmul.f32 %v427, 0.1
        %v536 = vmul.f32 %v428, 0.1
        %v537 = vmul.f32 %v429, 0.1
        %v538 = vsel %vm522, %v422, %v530
        %v539 = vsel %vm523, %v423, %v531
        %v540 = vsel %vm524, %v424, %v532
        %v541 = vsel %vm525, %v425, %v533
        %v542 = vsel %vm526, %v426, %v534
        %v543 = vsel %vm527, %v427, %v535
        %v544 = vsel %vm528, %v428, %v536
        %v545 = vsel %vm529, %v429, %v537
        %v546 = vsel %vm465, %v538, 0.0
        %v547 = vsel %vm466, %v539, 0.0
        %v548 = vsel %vm467, %v540, 0.0
        %v549 = vsel %vm468, %v541, 0.0
        %v550 = vsel %vm469, %v542, 0.0
        %v551 = vsel %vm470, %v543, 0.0
        %v552 = vsel %vm471, %v544, 0.0
        %v553 = vsel %vm472, %v545, 0.0
        %vm562 = vcmask 1041408
        %v563 = vrot.slane %v546, 6
        %v564 = vrot.slane %v547, 6
        %v565 = vsel %vm562, %v563, %v564
        %v566 = vrot.slane %v548, 6
        %v567 = vsel %vm562, %v564, %v566
        %v568 = vrot.slane %v549, 6
        %v569 = vsel %vm562, %v566, %v568
        %v570 = vrot.slane %v550, 6
        %v571 = vsel %vm562, %v568, %v570
        %v572 = vrot.slane %v551, 6
        %v573 = vsel %vm562, %v570, %v572
        %v574 = vrot.slane %v552, 6
        %v575 = vsel %vm562, %v572, %v574
        %v576 = vrot.slane %v553, 6
        %v577 = vsel %vm562, %v574, %v576
        %v587 = vsel %vm562, 0.0, %v563
        %v588 = vsel %vm562, %v576, 0.0
        %vm591 = vcmask 1045504
        %v592 = vrot.slane %v587, 2
        %v593 = vrot.slane %v565, 2
        %v594 = vsel %vm591, %v592, %v593
        %v595 = vrot.slane %v567, 2
        %v596 = vsel %vm591, %v593, %v595
        %v597 = vrot.slane %v569, 2
        %v598 = vsel %vm591, %v595, %v597
        %v599 = vrot.slane %v571, 2
        %v600 = vsel %vm591, %v597, %v599
        %v601 = vrot.slane %v573, 2
        %v602 = vsel %vm591, %v599, %v601
        %v603 = vrot.slane %v575, 2
        %v604 = vsel %vm591, %v601, %v603
        %v605 = vrot.slane %v577, 2
        %v606 = vsel %vm591, %v603, %v605
        %v607 = vrot.slane %v588, 2
        %v608 = vsel %vm591, %v605, %v607
        %vm617 = vcmask 1043456
        %v618 = vrot.slane %v587, 4
        %v619 = vrot.slane %v565, 4
        %v620 = vsel %vm617, %v618, %v619
        %v621 = vrot.slane %v567, 4
        %v622 = vsel %vm617, %v619, %v621
        %v623 = vrot.slane %v569, 4
        %v624 = vsel %vm617, %v621, %v623
        %v625 = vrot.slane %v571, 4
        %v626 = vsel %vm617, %v623, %v625
        %v627 = vrot.slane %v573, 4
        %v628 = vsel %vm617, %v625, %v627
        %v629 = vrot.slane %v575, 4
        %v630 = vsel %vm617, %v627, %v629
        %v631 = vrot.slane %v577, 4
        %v632 = vsel %vm617, %v629, %v631
        %v633 = vrot.slane %v588, 4
        %v634 = vsel %vm617, %v631, %v633
        %v644 = vlaneseq
        %v645 = vshrl.u32 %v644, 7
        %v646 = vsub.s32 0, %v645
        %v647 = vrot.slane %v521, %v646
        %649 = vmatprep.subr.mxu0 0.0
        %650 = vmatpush1.msra.mxu0 %v473
        %651 = vmatprep.subr.mxu0 0.0
        %652 = vmatpush1.msra.mxu0 %v474
        %653 = vmatprep.subr.mxu0 0.0
        %654 = vmatpush1.msra.mxu0 %v475
        %655 = vmatprep.subr.mxu0 0.0
        %656 = vmatpush1.msra.mxu0 %v476
        %657 = vmatprep.subr.mxu0 0.0
        %658 = vmatpush1.msra.mxu0 %v477
        %659 = vmatprep.subr.mxu0 0.0
        %660 = vmatpush1.msra.mxu0 %v478
        %661 = vmatprep.subr.mxu0 0.0
        %662 = vmatpush1.msra.mxu0 %v479
        %663 = vmatprep.subr.mxu0 0.0
        %664 = vmatpush1.msra.mxu0 %v480
        %665 = vmatprep.subr.mxu0 0.0
        %666 = vmatpush1.msra.mxu0 %v481
        %667 = vmatprep.subr.mxu0 0.0
        %668 = vmatpush1.msra.mxu0 %v482
        %669 = vmatprep.subr.mxu0 0.0
        %670 = vmatpush1.msra.mxu0 %v483
        %671 = vmatprep.subr.mxu0 0.0
        %672 = vmatpush1.msra.mxu0 %v484
        %673 = vmatprep.subr.mxu0 0.0
        %674 = vmatpush1.msra.mxu0 %v485
        %675 = vmatprep.subr.mxu0 0.0
        %676 = vmatpush1.msra.mxu0 %v486
        %677 = vmatprep.subr.mxu0 0.0
        %678 = vmatpush1.msra.mxu0 %v487
        %679 = vmatprep.subr.mxu0 0.0
        %680 = vmatpush1.msra.mxu0 %v488
        %681 = vmatprep.subr.mxu0 0.0
        %682 = vmatpush1.msra.mxu0 %v489
        %683 = vmatprep.subr.mxu0 0.0
        %684 = vmatpush1.msra.mxu0 %v490
        %685 = vmatprep.subr.mxu0 0.0
        %686 = vmatpush1.msra.mxu0 %v491
        %687 = vmatprep.subr.mxu0 0.0
        %688 = vmatpush1.msra.mxu0 %v492
        %689 = vmatprep.subr.mxu0 0.0
        %690 = vmatpush1.msra.mxu0 %v493
        %691 = vmatprep.subr.mxu0 0.0
        %692 = vmatpush1.msra.mxu0 %v494
        %693 = vmatprep.subr.mxu0 0.0
        %694 = vmatpush1.msra.mxu0 %v495
        %695 = vmatprep.subr.mxu0 0.0
        %696 = vmatpush1.msra.mxu0 %v496
        %697 = vmatprep.subr.mxu0 0.0
        %698 = vmatpush1.msra.mxu0 %v497
        %699 = vmatprep.subr.mxu0 0.0
        %700 = vmatpush1.msra.mxu0 %v498
        %701 = vmatprep.subr.mxu0 0.0
        %702 = vmatpush1.msra.mxu0 %v499
        %703 = vmatprep.subr.mxu0 0.0
        %704 = vmatpush1.msra.mxu0 %v500
        %705 = vmatprep.subr.mxu0 0.0
        %706 = vmatpush1.msra.mxu0 %v501
        %707 = vmatprep.subr.mxu0 0.0
        %708 = vmatpush1.msra.mxu0 %v502
        %709 = vmatprep.subr.mxu0 0.0
        %710 = vmatpush1.msra.mxu0 %v503
        %711 = vmatprep.subr.mxu0 0.0
        %712 = vmatpush1.msra.mxu0 %v504
        %713 = vmatprep.mubr.f32.mxu0 %v594
        %714 = vmatmul.mubr.f32.gmra.mrb[0].mxu0 %v587
        %v715 = vpop.f32.mrb[0].mxu0
        %v716 = vadd.f32 %v647, %v715
        %v717 = vpop.f32.mrb[0].mxu0
        %718 = vmatprep.mubr.f32.mxu0 %v596
        %719 = vmatmul.mubr.f32.gmra.mrb[0].mxu0 %v565
        %v720 = vpop.f32.mrb[0].mxu0
        %v721 = vadd.f32 %v647, %v720
        %v722 = vpop.f32.mrb[0].mxu0
        %723 = vmatprep.mubr.f32.mxu0 %v598
        %724 = vmatmul.mubr.f32.gmra.mrb[0].mxu0 %v567
        %v725 = vpop.f32.mrb[0].mxu0
        %v726 = vadd.f32 %v647, %v725
        %v727 = vpop.f32.mrb[0].mxu0
        %728 = vmatprep.mubr.f32.mxu0 %v600
        %729 = vmatmul.mubr.f32.gmra.mrb[0].mxu0 %v569
        %v730 = vpop.f32.mrb[0].mxu0
        %v731 = vadd.f32 %v647, %v730
        %v732 = vpop.f32.mrb[0].mxu0
        %733 = vmatprep.mubr.f32.mxu0 %v602
        %734 = vmatmul.mubr.f32.gmra.mrb[0].mxu0 %v571
        %v735 = vpop.f32.mrb[0].mxu0
        %v736 = vadd.f32 %v647, %v735
        %v737 = vpop.f32.mrb[0].mxu0
        %738 = vmatprep.mubr.f32.mxu0 %v604
        %739 = vmatmul.mubr.f32.gmra.mrb[0].mxu0 %v573
        %v740 = vpop.f32.mrb[0].mxu0
        %v741 = vadd.f32 %v647, %v740
        %v742 = vpop.f32.mrb[0].mxu0
        %743 = vmatprep.mubr.f32.mxu0 %v606
        %744 = vmatmul.mubr.f32.gmra.mrb[0].mxu0 %v575
        %v745 = vpop.f32.mrb[0].mxu0
        %v746 = vadd.f32 %v647, %v745
        %v747 = vpop.f32.mrb[0].mxu0
        %748 = vmatprep.mubr.f32.mxu0 %v608
        %749 = vmatmul.mubr.f32.gmra.mrb[0].mxu0 %v577
        %v750 = vpop.f32.mrb[0].mxu0
        %v751 = vadd.f32 %v647, %v750
        %v752 = vpop.f32.mrb[0].mxu0
        %753 = vdwg.mxu0
        %754 = vmatprep.subr.mxu0 0.0
        %755 = vmatpush1.msra.mxu0 %v505
        %756 = vmatprep.subr.mxu0 0.0
        %757 = vmatpush1.msra.mxu0 %v506
        %758 = vmatprep.subr.mxu0 0.0
        %759 = vmatpush1.msra.mxu0 %v507
        %760 = vmatprep.subr.mxu0 0.0
        %761 = vmatpush1.msra.mxu0 %v508
        %762 = vmatprep.subr.mxu0 0.0
        %763 = vmatpush1.msra.mxu0 %v509
        %764 = vmatprep.subr.mxu0 0.0
        %765 = vmatpush1.msra.mxu0 %v510
        %766 = vmatprep.subr.mxu0 0.0
        %767 = vmatpush1.msra.mxu0 %v511
        %768 = vmatprep.subr.mxu0 0.0
        %769 = vmatpush1.msra.mxu0 %v512
        %770 = vmatprep.subr.mxu0 0.0
        %771 = vmatpush1.msra.mxu0 %v513
        %772 = vmatprep.subr.mxu0 0.0
        %773 = vmatpush1.msra.mxu0 %v514
        %774 = vmatprep.subr.mxu0 0.0
        %775 = vmatpush1.msra.mxu0 %v515
        %776 = vmatprep.subr.mxu0 0.0
        %777 = vmatpush1.msra.mxu0 %v516
        %778 = vmatprep.subr.mxu0 0.0
        %779 = vmatpush1.msra.mxu0 %v517
        %780 = vmatprep.subr.mxu0 0.0
        %781 = vmatpush1.msra.mxu0 %v518
        %782 = vmatprep.subr.mxu0 0.0
        %783 = vmatpush1.msra.mxu0 %v519
        %784 = vmatprep.subr.mxu0 0.0
        %785 = vmatpush1.msra.mxu0 %v520
        %786 = vmatprep.subr.mxu0 0.0
        %787 = vmatpush1.msra.mxu0 0.0
        %788 = vmatprep.subr.mxu0 0.0
        %789 = vmatpush1.msra.mxu0 0.0
        %790 = vmatprep.subr.mxu0 0.0
        %791 = vmatpush1.msra.mxu0 0.0
        %792 = vmatprep.subr.mxu0 0.0
        %793 = vmatpush1.msra.mxu0 0.0
        %794 = vmatprep.subr.mxu0 0.0
        %795 = vmatpush1.msra.mxu0 0.0
        %796 = vmatprep.subr.mxu0 0.0
        %797 = vmatpush1.msra.mxu0 0.0
        %798 = vmatprep.subr.mxu0 0.0
        %799 = vmatpush1.msra.mxu0 0.0
        %800 = vmatprep.subr.mxu0 0.0
        %801 = vmatpush1.msra.mxu0 0.0
        %802 = vmatprep.subr.mxu0 0.0
        %803 = vmatpush1.msra.mxu0 0.0
        %804 = vmatprep.subr.mxu0 0.0
        %805 = vmatpush1.msra.mxu0 0.0
        %806 = vmatprep.subr.mxu0 0.0
        %807 = vmatpush1.msra.mxu0 0.0
        %808 = vmatprep.subr.mxu0 0.0
        %809 = vmatpush1.msra.mxu0 0.0
        %810 = vmatprep.subr.mxu0 0.0
        %811 = vmatpush1.msra.mxu0 0.0
        %812 = vmatprep.subr.mxu0 0.0
        %813 = vmatpush1.msra.mxu0 0.0
        %814 = vmatprep.subr.mxu0 0.0
        %815 = vmatpush1.msra.mxu0 0.0
        %816 = vmatprep.subr.mxu0 0.0
        %817 = vmatpush1.msra.mxu0 0.0
        %818 = vmatprep.mubr.f32.mxu0 0.0
        %819 = vmatmul.mubr.f32.gmra.mrb[0].mxu0 %v620
        %v820 = vpop.f32.mrb[0].mxu0
        %v821 = vadd.f32 %v716, %v820
        %v822 = vpop.f32.mrb[0].mxu0
        %823 = vmatprep.mubr.f32.mxu0 0.0
        %824 = vmatmul.mubr.f32.gmra.mrb[0].mxu0 %v622
        %v825 = vpop.f32.mrb[0].mxu0
        %v826 = vadd.f32 %v721, %v825
        %v827 = vpop.f32.mrb[0].mxu0
        %828 = vmatprep.mubr.f32.mxu0 0.0
        %829 = vmatmul.mubr.f32.gmra.mrb[0].mxu0 %v624
        %v830 = vpop.f32.mrb[0].mxu0
        %v831 = vadd.f32 %v726, %v830
        %v832 = vpop.f32.mrb[0].mxu0
        %833 = vmatprep.mubr.f32.mxu0 0.0
        %834 = vmatmul.mubr.f32.gmra.mrb[0].mxu0 %v626
        %v835 = vpop.f32.mrb[0].mxu0
        %v836 = vadd.f32 %v731, %v835
        %v837 = vpop.f32.mrb[0].mxu0
        %838 = vmatprep.mubr.f32.mxu0 0.0
        %839 = vmatmul.mubr.f32.gmra.mrb[0].mxu0 %v628
        %v840 = vpop.f32.mrb[0].mxu0
        %v841 = vadd.f32 %v736, %v840
        %v842 = vpop.f32.mrb[0].mxu0
        %843 = vmatprep.mubr.f32.mxu0 0.0
        %844 = vmatmul.mubr.f32.gmra.mrb[0].mxu0 %v630
        %v845 = vpop.f32.mrb[0].mxu0
        %v846 = vadd.f32 %v741, %v845
        %v847 = vpop.f32.mrb[0].mxu0
        %848 = vmatprep.mubr.f32.mxu0 0.0
        %849 = vmatmul.mubr.f32.gmra.mrb[0].mxu0 %v632
        %v850 = vpop.f32.mrb[0].mxu0
        %v851 = vadd.f32 %v746, %v850
        %v852 = vpop.f32.mrb[0].mxu0
        %853 = vmatprep.mubr.f32.mxu0 0.0
        %854 = vmatmul.mubr.f32.gmra.mrb[0].mxu0 %v634
        %v855 = vpop.f32.mrb[0].mxu0
        %v856 = vadd.f32 %v751, %v855
        %v857 = vpop.f32.mrb[0].mxu0
        %858 = vdwg.mxu0
        %v859 = vadd.f32 %v422, %v821
        %v860 = vadd.f32 %v423, %v826
        %v861 = vadd.f32 %v424, %v831
        %v862 = vadd.f32 %v425, %v836
        %v863 = vadd.f32 %v426, %v841
        %v864 = vadd.f32 %v427, %v846
        %v865 = vadd.f32 %v428, %v851
        %v866 = vadd.f32 %v429, %v856
        %v867 = vld [vmem:[#allocation7] sm:$0xff]
        %v868 = vld [vmem:[#allocation7 + $0x8] sm:$0xff]
        %v869 = vld [vmem:[#allocation7 + $0x10] sm:$0xff]
        %v870 = vld [vmem:[#allocation7 + $0x18] sm:$0xff]
        %v871 = vld [vmem:[#allocation7 + $0x20] sm:$0xff]
        %v872 = vld [vmem:[#allocation7 + $0x28] sm:$0xff]
        %v873 = vld [vmem:[#allocation7 + $0x30] sm:$0xff]
        %v874 = vld [vmem:[#allocation7 + $0x38] sm:$0xff]
        %v875 = vld [vmem:[#allocation7 + $0x40] sm:$0xff]
        %v876 = vld [vmem:[#allocation7 + $0x48] sm:$0xff]
        %v877 = vld [vmem:[#allocation7 + $0x50] sm:$0xff]
        %v878 = vld [vmem:[#allocation7 + $0x58] sm:$0xff]
        %v879 = vld [vmem:[#allocation7 + $0x60] sm:$0xff]
        %v880 = vld [vmem:[#allocation7 + $0x68] sm:$0xff]
        %v881 = vld [vmem:[#allocation7 + $0x70] sm:$0xff]
        %v882 = vld [vmem:[#allocation7 + $0x78] sm:$0xff]
        %v883 = vld [vmem:[#allocation7 + $0x80] sm:$0xff]
        %v884 = vld [vmem:[#allocation7 + $0x88] sm:$0xff]
        %v885 = vld [vmem:[#allocation7 + $0x90] sm:$0xff]
        %v886 = vld [vmem:[#allocation7 + $0x98] sm:$0xff]
        %v887 = vld [vmem:[#allocation7 + $0xa0] sm:$0xff]
        %v888 = vld [vmem:[#allocation7 + $0xa8] sm:$0xff]
        %v889 = vld [vmem:[#allocation7 + $0xb0] sm:$0xff]
        %v890 = vld [vmem:[#allocation7 + $0xb8] sm:$0xff]
        %v891 = vld [vmem:[#allocation7 + $0xc0] sm:$0xff]
        %v892 = vld [vmem:[#allocation7 + $0xc8] sm:$0xff]
        %v893 = vld [vmem:[#allocation7 + $0xd0] sm:$0xff]
        %v894 = vld [vmem:[#allocation7 + $0xd8] sm:$0xff]
        %v895 = vld [vmem:[#allocation7 + $0xe0] sm:$0xff]
        %v896 = vld [vmem:[#allocation7 + $0xe8] sm:$0xff]
        %v897 = vld [vmem:[#allocation7 + $0xf0] sm:$0xff]
        %v898 = vld [vmem:[#allocation7 + $0xf8] sm:$0xff]
        %v899 = vld [vmem:[#allocation7 + $0x100] sm:$0xff]
        %v900 = vld [vmem:[#allocation7 + $0x108] sm:$0xff]
        %v901 = vld [vmem:[#allocation7 + $0x110] sm:$0xff]
        %v902 = vld [vmem:[#allocation7 + $0x118] sm:$0xff]
        %v903 = vld [vmem:[#allocation7 + $0x120] sm:$0xff]
        %v904 = vld [vmem:[#allocation7 + $0x128] sm:$0xff]
        %v905 = vld [vmem:[#allocation7 + $0x130] sm:$0xff]
        %v906 = vld [vmem:[#allocation7 + $0x138] sm:$0xff]
        %v907 = vld [vmem:[#allocation7 + $0x140] sm:$0xff]
        %v908 = vld [vmem:[#allocation7 + $0x148] sm:$0xff]
        %v909 = vld [vmem:[#allocation7 + $0x150] sm:$0xff]
        %v910 = vld [vmem:[#allocation7 + $0x158] sm:$0xff]
        %v911 = vld [vmem:[#allocation7 + $0x160] sm:$0xff]
        %v912 = vld [vmem:[#allocation7 + $0x168] sm:$0xff]
        %v913 = vld [vmem:[#allocation7 + $0x170] sm:$0xff]
        %v914 = vld [vmem:[#allocation7 + $0x178] sm:$0xff]
        %v915 = vld [vmem:[%s4] sm:$0x1]
        %vm916 = vcmp.gt.f32.partialorder %v859, 0.0
        %vm917 = vcmp.gt.f32.partialorder %v860, 0.0
        %vm918 = vcmp.gt.f32.partialorder %v861, 0.0
        %vm919 = vcmp.gt.f32.partialorder %v862, 0.0
        %vm920 = vcmp.gt.f32.partialorder %v863, 0.0
        %vm921 = vcmp.gt.f32.partialorder %v864, 0.0
        %vm922 = vcmp.gt.f32.partialorder %v865, 0.0
        %vm923 = vcmp.gt.f32.partialorder %v866, 0.0
        %v924 = vmul.f32 %v859, 0.1
        %v925 = vmul.f32 %v860, 0.1
        %v926 = vmul.f32 %v861, 0.1
        %v927 = vmul.f32 %v862, 0.1
        %v928 = vmul.f32 %v863, 0.1
        %v929 = vmul.f32 %v864, 0.1
        %v930 = vmul.f32 %v865, 0.1
        %v931 = vmul.f32 %v866, 0.1
        %v932 = vsel %vm916, %v859, %v924
        %v933 = vsel %vm917, %v860, %v925
        %v934 = vsel %vm918, %v861, %v926
        %v935 = vsel %vm919, %v862, %v927
        %v936 = vsel %vm920, %v863, %v928
        %v937 = vsel %vm921, %v864, %v929
        %v938 = vsel %vm922, %v865, %v930
        %v939 = vsel %vm923, %v866, %v931
        %v940 = vsel %vm465, %v932, 0.0
        %v941 = vsel %vm466, %v933, 0.0
        %v942 = vsel %vm467, %v934, 0.0
        %v943 = vsel %vm468, %v935, 0.0
        %v944 = vsel %vm469, %v936, 0.0
        %v945 = vsel %vm470, %v937, 0.0
        %v946 = vsel %vm471, %v938, 0.0
        %v947 = vsel %vm472, %v939, 0.0
        %vm956 = vcmask 1040384
        %v957 = vrot.slane %v940, 7
        %v958 = vrot.slane %v941, 7
        %v959 = vsel %vm956, %v957, %v958
        %v960 = vrot.slane %v942, 7
        %v961 = vsel %vm956, %v958, %v960
        %v962 = vrot.slane %v943, 7
        %v963 = vsel %vm956, %v960, %v962
        %v964 = vrot.slane %v944, 7
        %v965 = vsel %vm956, %v962, %v964
        %v966 = vrot.slane %v945, 7
        %v967 = vsel %vm956, %v964, %v966
        %v968 = vrot.slane %v946, 7
        %v969 = vsel %vm956, %v966, %v968
        %v970 = vrot.slane %v947, 7
        %v971 = vsel %vm956, %v968, %v970
        %v981 = vsel %vm956, 0.0, %v957
        %v982 = vsel %vm956, %v970, 0.0
        %vm985 = vcmask 1046528
        %v986 = vrot.slane %v981, 1
        %v987 = vrot.slane %v959, 1
        %v988 = vsel %vm985, %v986, %v987
        %v989 = vrot.slane %v961, 1
        %v990 = vsel %vm985, %v987, %v989
        %v991 = vrot.slane %v963, 1
        %v992 = vsel %vm985, %v989, %v991
        %v993 = vrot.slane %v965, 1
        %v994 = vsel %vm985, %v991, %v993
        %v995 = vrot.slane %v967, 1
        %v996 = vsel %vm985, %v993, %v995
        %v997 = vrot.slane %v969, 1
        %v998 = vsel %vm985, %v995, %v997
        %v999 = vrot.slane %v971, 1
        %v1000 = vsel %vm985, %v997, %v999
        %v1001 = vrot.slane %v982, 1
        %v1002 = vsel %vm985, %v999, %v1001
        %v1011 = vrot.slane %v981, 2
        %v1012 = vrot.slane %v959, 2
        %v1013 = vsel %vm591, %v1011, %v1012
        %v1014 = vrot.slane %v961, 2
        %v1015 = vsel %vm591, %v1012, %v1014
        %v1016 = vrot.slane %v963, 2
        %v1017 = vsel %vm591, %v1014, %v1016
        %v1018 = vrot.slane %v965, 2
        %v1019 = vsel %vm591, %v1016, %v1018
        %v1020 = vrot.slane %v967, 2
        %v1021 = vsel %vm591, %v1018, %v1020
        %v1022 = vrot.slane %v969, 2
        %v1023 = vsel %vm591, %v1020, %v1022
        %v1024 = vrot.slane %v971, 2
        %v1025 = vsel %vm591, %v1022, %v1024
        %v1026 = vrot.slane %v982, 2
        %v1027 = vsel %vm591, %v1024, %v1026
        %v1037 = vlaneseq
        %v1038 = vshrl.u32 %v1037, 7
        %v1039 = vsub.s32 0, %v1038
        %v1040 = vrot.slane %v915, %v1039
        %1042 = vmatprep.subr.mxu0 0.0
        %1043 = vmatpush1.msra.mxu0 %v867
        %1044 = vmatprep.subr.mxu0 0.0
        %1045 = vmatpush1.msra.mxu0 %v868
        %1046 = vmatprep.subr.mxu0 0.0
        %1047 = vmatpush1.msra.mxu0 %v869
        %1048 = vmatprep.subr.mxu0 0.0
        %1049 = vmatpush1.msra.mxu0 %v870
        %1050 = vmatprep.subr.mxu0 0.0
        %1051 = vmatpush1.msra.mxu0 %v871
        %1052 = vmatprep.subr.mxu0 0.0
        %1053 = vmatpush1.msra.mxu0 %v872
        %1054 = vmatprep.subr.mxu0 0.0
        %1055 = vmatpush1.msra.mxu0 %v873
        %1056 = vmatprep.subr.mxu0 0.0
        %1057 = vmatpush1.msra.mxu0 %v874
        %1058 = vmatprep.subr.mxu0 0.0
        %1059 = vmatpush1.msra.mxu0 %v875
        %1060 = vmatprep.subr.mxu0 0.0
        %1061 = vmatpush1.msra.mxu0 %v876
        %1062 = vmatprep.subr.mxu0 0.0
        %1063 = vmatpush1.msra.mxu0 %v877
        %1064 = vmatprep.subr.mxu0 0.0
        %1065 = vmatpush1.msra.mxu0 %v878
        %1066 = vmatprep.subr.mxu0 0.0
        %1067 = vmatpush1.msra.mxu0 %v879
        %1068 = vmatprep.subr.mxu0 0.0
        %1069 = vmatpush1.msra.mxu0 %v880
        %1070 = vmatprep.subr.mxu0 0.0
        %1071 = vmatpush1.msra.mxu0 %v881
        %1072 = vmatprep.subr.mxu0 0.0
        %1073 = vmatpush1.msra.mxu0 %v882
        %1074 = vmatprep.subr.mxu0 0.0
        %1075 = vmatpush1.msra.mxu0 %v883
        %1076 = vmatprep.subr.mxu0 0.0
        %1077 = vmatpush1.msra.mxu0 %v884
        %1078 = vmatprep.subr.mxu0 0.0
        %1079 = vmatpush1.msra.mxu0 %v885
        %1080 = vmatprep.subr.mxu0 0.0
        %1081 = vmatpush1.msra.mxu0 %v886
        %1082 = vmatprep.subr.mxu0 0.0
        %1083 = vmatpush1.msra.mxu0 %v887
        %1084 = vmatprep.subr.mxu0 0.0
        %1085 = vmatpush1.msra.mxu0 %v888
        %1086 = vmatprep.subr.mxu0 0.0
        %1087 = vmatpush1.msra.mxu0 %v889
        %1088 = vmatprep.subr.mxu0 0.0
        %1089 = vmatpush1.msra.mxu0 %v890
        %1090 = vmatprep.subr.mxu0 0.0
        %1091 = vmatpush1.msra.mxu0 %v891
        %1092 = vmatprep.subr.mxu0 0.0
        %1093 = vmatpush1.msra.mxu0 %v892
        %1094 = vmatprep.subr.mxu0 0.0
        %1095 = vmatpush1.msra.mxu0 %v893
        %1096 = vmatprep.subr.mxu0 0.0
        %1097 = vmatpush1.msra.mxu0 %v894
        %1098 = vmatprep.subr.mxu0 0.0
        %1099 = vmatpush1.msra.mxu0 %v895
        %1100 = vmatprep.subr.mxu0 0.0
        %1101 = vmatpush1.msra.mxu0 %v896
        %1102 = vmatprep.subr.mxu0 0.0
        %1103 = vmatpush1.msra.mxu0 %v897
        %1104 = vmatprep.subr.mxu0 0.0
        %1105 = vmatpush1.msra.mxu0 %v898
        %1106 = vmatprep.mubr.f32.mxu0 %v988
        %1107 = vmatmul.mubr.f32.gmra.mrb[0].mxu0 %v981
        %v1108 = vpop.f32.mrb[0].mxu0
        %v1109 = vpop.f32.mrb[0].mxu0
        %1110 = vmatprep.mubr.f32.mxu0 %v990
        %1111 = vmatmul.mubr.f32.gmra.mrb[0].mxu0 %v959
        %v1112 = vpop.f32.mrb[0].mxu0
        %v1113 = vpop.f32.mrb[0].mxu0
        %1114 = vmatprep.mubr.f32.mxu0 %v992
        %1115 = vmatmul.mubr.f32.gmra.mrb[0].mxu0 %v961
        %v1116 = vpop.f32.mrb[0].mxu0
        %v1117 = vadd.f32 %v1040, %v1116
        %v1118 = vpop.f32.mrb[0].mxu0
        %1119 = vmatprep.mubr.f32.mxu0 %v994
        %1120 = vmatmul.mubr.f32.gmra.mrb[0].mxu0 %v963
        %v1121 = vpop.f32.mrb[0].mxu0
        %v1122 = vadd.f32 %v1040, %v1121
        %v1123 = vpop.f32.mrb[0].mxu0
        %1124 = vmatprep.mubr.f32.mxu0 %v996
        %1125 = vmatmul.mubr.f32.gmra.mrb[0].mxu0 %v965
        %v1126 = vpop.f32.mrb[0].mxu0
        %v1127 = vadd.f32 %v1040, %v1126
        %v1128 = vpop.f32.mrb[0].mxu0
        %1129 = vmatprep.mubr.f32.mxu0 %v998
        %1130 = vmatmul.mubr.f32.gmra.mrb[0].mxu0 %v967
        %v1131 = vpop.f32.mrb[0].mxu0
        %v1132 = vadd.f32 %v1040, %v1131
        %v1133 = vpop.f32.mrb[0].mxu0
        %1134 = vmatprep.mubr.f32.mxu0 %v1000
        %1135 = vmatmul.mubr.f32.gmra.mrb[0].mxu0 %v969
        %v1136 = vpop.f32.mrb[0].mxu0
        %v1137 = vpop.f32.mrb[0].mxu0
        %1138 = vmatprep.mubr.f32.mxu0 %v1002
        %1139 = vmatmul.mubr.f32.gmra.mrb[0].mxu0 %v971
        %v1140 = vpop.f32.mrb[0].mxu0
        %v1141 = vpop.f32.mrb[0].mxu0
        %1142 = vdwg.mxu0
        %1143 = vmatprep.subr.mxu0 0.0
        %1144 = vmatpush1.msra.mxu0 %v899
        %1145 = vmatprep.subr.mxu0 0.0
        %1146 = vmatpush1.msra.mxu0 %v900
        %1147 = vmatprep.subr.mxu0 0.0
        %1148 = vmatpush1.msra.mxu0 %v901
        %1149 = vmatprep.subr.mxu0 0.0
        %1150 = vmatpush1.msra.mxu0 %v902
        %1151 = vmatprep.subr.mxu0 0.0
        %1152 = vmatpush1.msra.mxu0 %v903
        %1153 = vmatprep.subr.mxu0 0.0
        %1154 = vmatpush1.msra.mxu0 %v904
        %1155 = vmatprep.subr.mxu0 0.0
        %1156 = vmatpush1.msra.mxu0 %v905
        %1157 = vmatprep.subr.mxu0 0.0
        %1158 = vmatpush1.msra.mxu0 %v906
        %1159 = vmatprep.subr.mxu0 0.0
        %1160 = vmatpush1.msra.mxu0 %v907
        %1161 = vmatprep.subr.mxu0 0.0
        %1162 = vmatpush1.msra.mxu0 %v908
        %1163 = vmatprep.subr.mxu0 0.0
        %1164 = vmatpush1.msra.mxu0 %v909
        %1165 = vmatprep.subr.mxu0 0.0
        %1166 = vmatpush1.msra.mxu0 %v910
        %1167 = vmatprep.subr.mxu0 0.0
        %1168 = vmatpush1.msra.mxu0 %v911
        %1169 = vmatprep.subr.mxu0 0.0
        %1170 = vmatpush1.msra.mxu0 %v912
        %1171 = vmatprep.subr.mxu0 0.0
        %1172 = vmatpush1.msra.mxu0 %v913
        %1173 = vmatprep.subr.mxu0 0.0
        %1174 = vmatpush1.msra.mxu0 %v914
        %1175 = vmatprep.subr.mxu0 0.0
        %1176 = vmatpush1.msra.mxu0 0.0
        %1177 = vmatprep.subr.mxu0 0.0
        %1178 = vmatpush1.msra.mxu0 0.0
        %1179 = vmatprep.subr.mxu0 0.0
        %1180 = vmatpush1.msra.mxu0 0.0
        %1181 = vmatprep.subr.mxu0 0.0
        %1182 = vmatpush1.msra.mxu0 0.0
        %1183 = vmatprep.subr.mxu0 0.0
        %1184 = vmatpush1.msra.mxu0 0.0
        %1185 = vmatprep.subr.mxu0 0.0
        %1186 = vmatpush1.msra.mxu0 0.0
        %1187 = vmatprep.subr.mxu0 0.0
        %1188 = vmatpush1.msra.mxu0 0.0
        %1189 = vmatprep.subr.mxu0 0.0
        %1190 = vmatpush1.msra.mxu0 0.0
        %1191 = vmatprep.subr.mxu0 0.0
        %1192 = vmatpush1.msra.mxu0 0.0
        %1193 = vmatprep.subr.mxu0 0.0
        %1194 = vmatpush1.msra.mxu0 0.0
        %1195 = vmatprep.subr.mxu0 0.0
        %1196 = vmatpush1.msra.mxu0 0.0
        %1197 = vmatprep.subr.mxu0 0.0
        %1198 = vmatpush1.msra.mxu0 0.0
        %1199 = vmatprep.subr.mxu0 0.0
        %1200 = vmatpush1.msra.mxu0 0.0
        %1201 = vmatprep.subr.mxu0 0.0
        %1202 = vmatpush1.msra.mxu0 0.0
        %1203 = vmatprep.subr.mxu0 0.0
        %1204 = vmatpush1.msra.mxu0 0.0
        %1205 = vmatprep.subr.mxu0 0.0
        %1206 = vmatpush1.msra.mxu0 0.0
        %1207 = vmatprep.mubr.f32.mxu0 0.0
        %1208 = vmatmul.mubr.f32.gmra.mrb[0].mxu0 %v1013
        %v1209 = vpop.f32.mrb[0].mxu0
        %v1210 = vpop.f32.mrb[0].mxu0
        %1211 = vmatprep.mubr.f32.mxu0 0.0
        %1212 = vmatmul.mubr.f32.gmra.mrb[0].mxu0 %v1015
        %v1213 = vpop.f32.mrb[0].mxu0
        %v1214 = vpop.f32.mrb[0].mxu0
        %1215 = vmatprep.mubr.f32.mxu0 0.0
        %1216 = vmatmul.mubr.f32.gmra.mrb[0].mxu0 %v1017
        %v1217 = vpop.f32.mrb[0].mxu0
        %v1218 = vadd.f32 %v1117, %v1217
        %v1219 = vpop.f32.mrb[0].mxu0
        %1220 = vmatprep.mubr.f32.mxu0 0.0
        %1221 = vmatmul.mubr.f32.gmra.mrb[0].mxu0 %v1019
        %v1222 = vpop.f32.mrb[0].mxu0
        %v1223 = vadd.f32 %v1122, %v1222
        %v1224 = vpop.f32.mrb[0].mxu0
        %1225 = vmatprep.mubr.f32.mxu0 0.0
        %1226 = vmatmul.mubr.f32.gmra.mrb[0].mxu0 %v1021
        %v1227 = vpop.f32.mrb[0].mxu0
        %v1228 = vadd.f32 %v1127, %v1227
        %v1229 = vpop.f32.mrb[0].mxu0
        %1230 = vmatprep.mubr.f32.mxu0 0.0
        %1231 = vmatmul.mubr.f32.gmra.mrb[0].mxu0 %v1023
        %v1232 = vpop.f32.mrb[0].mxu0
        %v1233 = vadd.f32 %v1132, %v1232
        %v1234 = vpop.f32.mrb[0].mxu0
        %1235 = vmatprep.mubr.f32.mxu0 0.0
        %1236 = vmatmul.mubr.f32.gmra.mrb[0].mxu0 %v1025
        %v1237 = vpop.f32.mrb[0].mxu0
        %v1238 = vpop.f32.mrb[0].mxu0
        %1239 = vmatprep.mubr.f32.mxu0 0.0
        %1240 = vmatmul.mubr.f32.gmra.mrb[0].mxu0 %v1027
        %v1241 = vpop.f32.mrb[0].mxu0
        %v1242 = vpop.f32.mrb[0].mxu0
        %1243 = vdwg.mxu0
        %v1244 = vadd.f32 %v861, %v1218
        %v1245 = vadd.f32 %v862, %v1223
        %v1246 = vadd.f32 %v863, %v1228
        %v1247 = vadd.f32 %v864, %v1233
        %v1248 = vadd.f32 %v1244, 0.0
        %v1249 = vadd.f32 %v1245, 0.0
        %v1250 = vadd.f32 %v1246, 0.0
        %v1251 = vadd.f32 %v1247, 0.0
        %v1252 = vld [vmem:[#allocation9] sm:$0xff]
        %v1253 = vld [vmem:[#allocation9 + $0x8] sm:$0xff]
        %v1254 = vld [vmem:[#allocation9 + $0x10] sm:$0xff]
        %v1255 = vld [vmem:[#allocation9 + $0x18] sm:$0xff]
        %v1256 = vld [vmem:[#allocation9 + $0x20] sm:$0xff]
        %v1257 = vld [vmem:[#allocation9 + $0x28] sm:$0xff]
        %v1258 = vld [vmem:[#allocation9 + $0x30] sm:$0xff]
        %v1259 = vld [vmem:[#allocation9 + $0x38] sm:$0xff]
        %v1260 = vld [vmem:[#allocation9 + $0x40] sm:$0xff]
        %v1261 = vld [vmem:[#allocation9 + $0x48] sm:$0xff]
        %v1262 = vld [vmem:[#allocation9 + $0x50] sm:$0xff]
        %v1263 = vld [vmem:[#allocation9 + $0x58] sm:$0xff]
        %v1264 = vld [vmem:[#allocation9 + $0x60] sm:$0xff]
        %v1265 = vld [vmem:[#allocation9 + $0x68] sm:$0xff]
        %v1266 = vld [vmem:[#allocation9 + $0x70] sm:$0xff]
        %v1267 = vld [vmem:[#allocation9 + $0x78] sm:$0xff]
        %v1268 = vld [vmem:[#allocation9 + $0x80] sm:$0xff]
        %v1269 = vld [vmem:[#allocation9 + $0x88] sm:$0xff]
        %v1270 = vld [vmem:[#allocation9 + $0x90] sm:$0xff]
        %v1271 = vld [vmem:[#allocation9 + $0x98] sm:$0xff]
        %v1272 = vld [vmem:[#allocation9 + $0xa0] sm:$0xff]
        %v1273 = vld [vmem:[#allocation9 + $0xa8] sm:$0xff]
        %v1274 = vld [vmem:[#allocation9 + $0xb0] sm:$0xff]
        %v1275 = vld [vmem:[#allocation9 + $0xb8] sm:$0xff]
        %v1276 = vld [vmem:[#allocation9 + $0xc0] sm:$0xff]
        %v1277 = vld [vmem:[#allocation9 + $0xc8] sm:$0xff]
        %v1278 = vld [vmem:[#allocation9 + $0xd0] sm:$0xff]
        %v1279 = vld [vmem:[#allocation9 + $0xd8] sm:$0xff]
        %v1280 = vld [vmem:[#allocation9 + $0xe0] sm:$0xff]
        %v1281 = vld [vmem:[#allocation9 + $0xe8] sm:$0xff]
        %v1282 = vld [vmem:[#allocation9 + $0xf0] sm:$0xff]
        %v1283 = vld [vmem:[#allocation9 + $0xf8] sm:$0xff]
        %v1284 = vld [vmem:[#allocation9 + $0x100] sm:$0xff]
        %v1285 = vld [vmem:[#allocation9 + $0x108] sm:$0xff]
        %v1286 = vld [vmem:[#allocation9 + $0x110] sm:$0xff]
        %v1287 = vld [vmem:[#allocation9 + $0x118] sm:$0xff]
        %v1288 = vld [vmem:[#allocation9 + $0x120] sm:$0xff]
        %v1289 = vld [vmem:[#allocation9 + $0x128] sm:$0xff]
        %v1290 = vld [vmem:[#allocation9 + $0x130] sm:$0xff]
        %v1291 = vld [vmem:[#allocation9 + $0x138] sm:$0xff]
        %v1292 = vld [vmem:[#allocation9 + $0x140] sm:$0xff]
        %v1293 = vld [vmem:[#allocation9 + $0x148] sm:$0xff]
        %v1294 = vld [vmem:[#allocation9 + $0x150] sm:$0xff]
        %v1295 = vld [vmem:[#allocation9 + $0x158] sm:$0xff]
        %v1296 = vld [vmem:[#allocation9 + $0x160] sm:$0xff]
        %v1297 = vld [vmem:[#allocation9 + $0x168] sm:$0xff]
        %v1298 = vld [vmem:[#allocation9 + $0x170] sm:$0xff]
        %v1299 = vld [vmem:[#allocation9 + $0x178] sm:$0xff]
        %v1300 = vld [vmem:[#allocation9 + $0x180] sm:$0xff]
        %v1301 = vld [vmem:[#allocation9 + $0x188] sm:$0xff]
        %v1302 = vld [vmem:[#allocation9 + $0x190] sm:$0xff]
        %v1303 = vld [vmem:[#allocation9 + $0x198] sm:$0xff]
        %v1304 = vld [vmem:[#allocation9 + $0x1a0] sm:$0xff]
        %v1305 = vld [vmem:[#allocation9 + $0x1a8] sm:$0xff]
        %v1306 = vld [vmem:[#allocation9 + $0x1b0] sm:$0xff]
        %v1307 = vld [vmem:[#allocation9 + $0x1b8] sm:$0xff]
        %v1308 = vld [vmem:[#allocation9 + $0x1c0] sm:$0xff]
        %v1309 = vld [vmem:[#allocation9 + $0x1c8] sm:$0xff]
        %v1310 = vld [vmem:[#allocation9 + $0x1d0] sm:$0xff]
        %v1311 = vld [vmem:[#allocation9 + $0x1d8] sm:$0xff]
        %v1312 = vld [vmem:[#allocation9 + $0x1e0] sm:$0xff]
        %v1313 = vld [vmem:[#allocation9 + $0x1e8] sm:$0xff]
        %v1314 = vld [vmem:[#allocation9 + $0x1f0] sm:$0xff]
        %v1315 = vld [vmem:[#allocation9 + $0x1f8] sm:$0xff]
        %v1316 = vld [vmem:[#allocation9 + $0x200] sm:$0xff]
        %v1317 = vld [vmem:[#allocation9 + $0x208] sm:$0xff]
        %v1318 = vld [vmem:[#allocation9 + $0x210] sm:$0xff]
        %v1319 = vld [vmem:[#allocation9 + $0x218] sm:$0xff]
        %v1320 = vld [vmem:[#allocation9 + $0x220] sm:$0xff]
        %v1321 = vld [vmem:[#allocation9 + $0x228] sm:$0xff]
        %v1322 = vld [vmem:[#allocation9 + $0x230] sm:$0xff]
        %v1323 = vld [vmem:[#allocation9 + $0x238] sm:$0xff]
        %v1324 = vld [vmem:[#allocation9 + $0x240] sm:$0xff]
        %v1325 = vld [vmem:[#allocation9 + $0x248] sm:$0xff]
        %v1326 = vld [vmem:[#allocation9 + $0x250] sm:$0xff]
        %v1327 = vld [vmem:[#allocation9 + $0x258] sm:$0xff]
        %v1328 = vld [vmem:[#allocation9 + $0x260] sm:$0xff]
        %v1329 = vld [vmem:[#allocation9 + $0x268] sm:$0xff]
        %v1330 = vld [vmem:[#allocation9 + $0x270] sm:$0xff]
        %v1331 = vld [vmem:[#allocation9 + $0x278] sm:$0xff]
        %v1332 = vld [vmem:[%s6] sm:$0x1]
        %v1333 = vrot.slane %v546, 2
        %v1334 = vrot.slane %v547, 2
        %v1335 = vsel %vm591, %v1333, %v1334
        %v1336 = vrot.slane %v548, 2
        %v1337 = vsel %vm591, %v1334, %v1336
        %v1338 = vrot.slane %v549, 2
        %v1339 = vsel %vm591, %v1336, %v1338
        %v1340 = vrot.slane %v550, 2
        %v1341 = vsel %vm591, %v1338, %v1340
        %v1342 = vrot.slane %v551, 2
        %v1343 = vsel %vm591, %v1340, %v1342
        %v1344 = vrot.slane %v552, 2
        %v1345 = vsel %vm591, %v1342, %v1344
        %v1346 = vrot.slane %v553, 2
        %v1347 = vsel %vm591, %v1344, %v1346
        %v1357 = vsel %vm591, 0.0, %v1333
        %v1358 = vsel %vm591, %v1346, 0.0
        %vm1361 = vcmask 1044480
        %v1362 = vrot.slane %v1357, 3
        %v1363 = vrot.slane %v1335, 3
        %v1364 = vsel %vm1361, %v1362, %v1363
        %v1365 = vrot.slane %v1337, 3
        %v1366 = vsel %vm1361, %v1363, %v1365
        %v1367 = vrot.slane %v1339, 3
        %v1368 = vsel %vm1361, %v1365, %v1367
        %v1369 = vrot.slane %v1341, 3
        %v1370 = vsel %vm1361, %v1367, %v1369
        %v1371 = vrot.slane %v1343, 3
        %v1372 = vsel %vm1361, %v1369, %v1371
        %v1373 = vrot.slane %v1345, 3
        %v1374 = vsel %vm1361, %v1371, %v1373
        %v1375 = vrot.slane %v1347, 3
        %v1376 = vsel %vm1361, %v1373, %v1375
        %v1377 = vrot.slane %v1358, 3
        %v1378 = vsel %vm1361, %v1375, %v1377
        %v1387 = vrot.slane %v1357, 6
        %v1388 = vrot.slane %v1335, 6
        %v1389 = vsel %vm562, %v1387, %v1388
        %v1390 = vrot.slane %v1337, 6
        %v1391 = vsel %vm562, %v1388, %v1390
        %v1392 = vrot.slane %v1339, 6
        %v1393 = vsel %vm562, %v1390, %v1392
        %v1394 = vrot.slane %v1341, 6
        %v1395 = vsel %vm562, %v1392, %v1394
        %v1396 = vrot.slane %v1343, 6
        %v1397 = vsel %vm562, %v1394, %v1396
        %v1398 = vrot.slane %v1345, 6
        %v1399 = vsel %vm562, %v1396, %v1398
        %v1400 = vrot.slane %v1347, 6
        %v1401 = vsel %vm562, %v1398, %v1400
        %v1402 = vrot.slane %v1358, 6
        %v1403 = vsel %vm562, %v1400, %v1402
        %v1413 = vrot.slane %v1335, 1
        %v1414 = vrot.slane %v1337, 1
        %v1415 = vsel %vm985, %v1413, %v1414
        %v1416 = vrot.slane %v1339, 1
        %v1417 = vsel %vm985, %v1414, %v1416
        %v1418 = vrot.slane %v1341, 1
        %v1419 = vsel %vm985, %v1416, %v1418
        %v1420 = vrot.slane %v1343, 1
        %v1421 = vsel %vm985, %v1418, %v1420
        %v1422 = vrot.slane %v1345, 1
        %v1423 = vsel %vm985, %v1420, %v1422
        %v1424 = vrot.slane %v1347, 1
        %v1425 = vsel %vm985, %v1422, %v1424
        %v1426 = vrot.slane %v1358, 1
        %v1427 = vsel %vm985, %v1424, %v1426
        %v1428 = vrot.slane 0.0, 1
        %v1429 = vsel %vm985, %v1426, %v1428
        %v1438 = vrot.slane %v1335, 4
        %v1439 = vrot.slane %v1337, 4
        %v1440 = vsel %vm617, %v1438, %v1439
        %v1441 = vrot.slane %v1339, 4
        %v1442 = vsel %vm617, %v1439, %v1441
        %v1443 = vrot.slane %v1341, 4
        %v1444 = vsel %vm617, %v1441, %v1443
        %v1445 = vrot.slane %v1343, 4
        %v1446 = vsel %vm617, %v1443, %v1445
        %v1447 = vrot.slane %v1345, 4
        %v1448 = vsel %vm617, %v1445, %v1447
        %v1449 = vrot.slane %v1347, 4
        %v1450 = vsel %vm617, %v1447, %v1449
        %v1451 = vrot.slane %v1358, 4
        %v1452 = vsel %vm617, %v1449, %v1451
        %v1453 = vrot.slane 0.0, 4
        %v1454 = vsel %vm617, %v1451, %v1453
        %v1464 = vlaneseq
        %v1465 = vshrl.u32 %v1464, 7
        %v1466 = vsub.s32 0, %v1465
        %v1467 = vrot.slane %v1332, %v1466
        %1469 = vmatprep.subr.mxu0 0.0
        %1470 = vmatpush1.msra.mxu0 %v1252
        %1471 = vmatprep.subr.mxu0 0.0
        %1472 = vmatpush1.msra.mxu0 %v1253
        %1473 = vmatprep.subr.mxu0 0.0
        %1474 = vmatpush1.msra.mxu0 %v1254
        %1475 = vmatprep.subr.mxu0 0.0
        %1476 = vmatpush1.msra.mxu0 %v1255
        %1477 = vmatprep.subr.mxu0 0.0
        %1478 = vmatpush1.msra.mxu0 %v1256
        %1479 = vmatprep.subr.mxu0 0.0
        %1480 = vmatpush1.msra.mxu0 %v1257
        %1481 = vmatprep.subr.mxu0 0.0
        %1482 = vmatpush1.msra.mxu0 %v1258
        %1483 = vmatprep.subr.mxu0 0.0
        %1484 = vmatpush1.msra.mxu0 %v1259
        %1485 = vmatprep.subr.mxu0 0.0
        %1486 = vmatpush1.msra.mxu0 %v1260
        %1487 = vmatprep.subr.mxu0 0.0
        %1488 = vmatpush1.msra.mxu0 %v1261
        %1489 = vmatprep.subr.mxu0 0.0
        %1490 = vmatpush1.msra.mxu0 %v1262
        %1491 = vmatprep.subr.mxu0 0.0
        %1492 = vmatpush1.msra.mxu0 %v1263
        %1493 = vmatprep.subr.mxu0 0.0
        %1494 = vmatpush1.msra.mxu0 %v1264
        %1495 = vmatprep.subr.mxu0 0.0
        %1496 = vmatpush1.msra.mxu0 %v1265
        %1497 = vmatprep.subr.mxu0 0.0
        %1498 = vmatpush1.msra.mxu0 %v1266
        %1499 = vmatprep.subr.mxu0 0.0
        %1500 = vmatpush1.msra.mxu0 %v1267
        %1501 = vmatprep.subr.mxu0 0.0
        %1502 = vmatpush1.msra.mxu0 %v1268
        %1503 = vmatprep.subr.mxu0 0.0
        %1504 = vmatpush1.msra.mxu0 %v1269
        %1505 = vmatprep.subr.mxu0 0.0
        %1506 = vmatpush1.msra.mxu0 %v1270
        %1507 = vmatprep.subr.mxu0 0.0
        %1508 = vmatpush1.msra.mxu0 %v1271
        %1509 = vmatprep.subr.mxu0 0.0
        %1510 = vmatpush1.msra.mxu0 %v1272
        %1511 = vmatprep.subr.mxu0 0.0
        %1512 = vmatpush1.msra.mxu0 %v1273
        %1513 = vmatprep.subr.mxu0 0.0
        %1514 = vmatpush1.msra.mxu0 %v1274
        %1515 = vmatprep.subr.mxu0 0.0
        %1516 = vmatpush1.msra.mxu0 %v1275
        %1517 = vmatprep.subr.mxu0 0.0
        %1518 = vmatpush1.msra.mxu0 %v1276
        %1519 = vmatprep.subr.mxu0 0.0
        %1520 = vmatpush1.msra.mxu0 %v1277
        %1521 = vmatprep.subr.mxu0 0.0
        %1522 = vmatpush1.msra.mxu0 %v1278
        %1523 = vmatprep.subr.mxu0 0.0
        %1524 = vmatpush1.msra.mxu0 %v1279
        %1525 = vmatprep.subr.mxu0 0.0
        %1526 = vmatpush1.msra.mxu0 %v1280
        %1527 = vmatprep.subr.mxu0 0.0
        %1528 = vmatpush1.msra.mxu0 %v1281
        %1529 = vmatprep.subr.mxu0 0.0
        %1530 = vmatpush1.msra.mxu0 %v1282
        %1531 = vmatprep.subr.mxu0 0.0
        %1532 = vmatpush1.msra.mxu0 %v1283
        %1533 = vmatprep.mubr.f32.mxu0 %v1364
        %1534 = vmatmul.mubr.f32.gmra.mrb[0].mxu0 %v1357
        %v1535 = vpop.f32.mrb[0].mxu0
        %v1536 = vadd.f32 %v1467, %v1535
        %v1537 = vpop.f32.mrb[0].mxu0
        %1538 = vmatprep.mubr.f32.mxu0 %v1366
        %1539 = vmatmul.mubr.f32.gmra.mrb[0].mxu0 %v1335
        %v1540 = vpop.f32.mrb[0].mxu0
        %v1541 = vadd.f32 %v1467, %v1540
        %v1542 = vpop.f32.mrb[0].mxu0
        %1543 = vmatprep.mubr.f32.mxu0 %v1368
        %1544 = vmatmul.mubr.f32.gmra.mrb[0].mxu0 %v1337
        %v1545 = vpop.f32.mrb[0].mxu0
        %v1546 = vadd.f32 %v1467, %v1545
        %v1547 = vpop.f32.mrb[0].mxu0
        %1548 = vmatprep.mubr.f32.mxu0 %v1370
        %1549 = vmatmul.mubr.f32.gmra.mrb[0].mxu0 %v1339
        %v1550 = vpop.f32.mrb[0].mxu0
        %v1551 = vadd.f32 %v1467, %v1550
        %v1552 = vpop.f32.mrb[0].mxu0
        %1553 = vmatprep.mubr.f32.mxu0 %v1372
        %1554 = vmatmul.mubr.f32.gmra.mrb[0].mxu0 %v1341
        %v1555 = vpop.f32.mrb[0].mxu0
        %v1556 = vadd.f32 %v1467, %v1555
        %v1557 = vpop.f32.mrb[0].mxu0
        %1558 = vmatprep.mubr.f32.mxu0 %v1374
        %1559 = vmatmul.mubr.f32.gmra.mrb[0].mxu0 %v1343
        %v1560 = vpop.f32.mrb[0].mxu0
        %v1561 = vadd.f32 %v1467, %v1560
        %v1562 = vpop.f32.mrb[0].mxu0
        %1563 = vmatprep.mubr.f32.mxu0 %v1376
        %1564 = vmatmul.mubr.f32.gmra.mrb[0].mxu0 %v1345
        %v1565 = vpop.f32.mrb[0].mxu0
        %v1566 = vadd.f32 %v1467, %v1565
        %v1567 = vpop.f32.mrb[0].mxu0
        %1568 = vmatprep.mubr.f32.mxu0 %v1378
        %1569 = vmatmul.mubr.f32.gmra.mrb[0].mxu0 %v1347
        %v1570 = vpop.f32.mrb[0].mxu0
        %v1571 = vadd.f32 %v1467, %v1570
        %v1572 = vpop.f32.mrb[0].mxu0
        %1573 = vdwg.mxu0
        %1574 = vmatprep.subr.mxu0 0.0
        %1575 = vmatpush1.msra.mxu0 %v1284
        %1576 = vmatprep.subr.mxu0 0.0
        %1577 = vmatpush1.msra.mxu0 %v1285
        %1578 = vmatprep.subr.mxu0 0.0
        %1579 = vmatpush1.msra.mxu0 %v1286
        %1580 = vmatprep.subr.mxu0 0.0
        %1581 = vmatpush1.msra.mxu0 %v1287
        %1582 = vmatprep.subr.mxu0 0.0
        %1583 = vmatpush1.msra.mxu0 %v1288
        %1584 = vmatprep.subr.mxu0 0.0
        %1585 = vmatpush1.msra.mxu0 %v1289
        %1586 = vmatprep.subr.mxu0 0.0
        %1587 = vmatpush1.msra.mxu0 %v1290
        %1588 = vmatprep.subr.mxu0 0.0
        %1589 = vmatpush1.msra.mxu0 %v1291
        %1590 = vmatprep.subr.mxu0 0.0
        %1591 = vmatpush1.msra.mxu0 %v1292
        %1592 = vmatprep.subr.mxu0 0.0
        %1593 = vmatpush1.msra.mxu0 %v1293
        %1594 = vmatprep.subr.mxu0 0.0
        %1595 = vmatpush1.msra.mxu0 %v1294
        %1596 = vmatprep.subr.mxu0 0.0
        %1597 = vmatpush1.msra.mxu0 %v1295
        %1598 = vmatprep.subr.mxu0 0.0
        %1599 = vmatpush1.msra.mxu0 %v1296
        %1600 = vmatprep.subr.mxu0 0.0
        %1601 = vmatpush1.msra.mxu0 %v1297
        %1602 = vmatprep.subr.mxu0 0.0
        %1603 = vmatpush1.msra.mxu0 %v1298
        %1604 = vmatprep.subr.mxu0 0.0
        %1605 = vmatpush1.msra.mxu0 %v1299
        %1606 = vmatprep.subr.mxu0 0.0
        %1607 = vmatpush1.msra.mxu0 %v1300
        %1608 = vmatprep.subr.mxu0 0.0
        %1609 = vmatpush1.msra.mxu0 %v1301
        %1610 = vmatprep.subr.mxu0 0.0
        %1611 = vmatpush1.msra.mxu0 %v1302
        %1612 = vmatprep.subr.mxu0 0.0
        %1613 = vmatpush1.msra.mxu0 %v1303
        %1614 = vmatprep.subr.mxu0 0.0
        %1615 = vmatpush1.msra.mxu0 %v1304
        %1616 = vmatprep.subr.mxu0 0.0
        %1617 = vmatpush1.msra.mxu0 %v1305
        %1618 = vmatprep.subr.mxu0 0.0
        %1619 = vmatpush1.msra.mxu0 %v1306
        %1620 = vmatprep.subr.mxu0 0.0
        %1621 = vmatpush1.msra.mxu0 %v1307
        %1622 = vmatprep.subr.mxu0 0.0
        %1623 = vmatpush1.msra.mxu0 %v1308
        %1624 = vmatprep.subr.mxu0 0.0
        %1625 = vmatpush1.msra.mxu0 %v1309
        %1626 = vmatprep.subr.mxu0 0.0
        %1627 = vmatpush1.msra.mxu0 %v1310
        %1628 = vmatprep.subr.mxu0 0.0
        %1629 = vmatpush1.msra.mxu0 %v1311
        %1630 = vmatprep.subr.mxu0 0.0
        %1631 = vmatpush1.msra.mxu0 %v1312
        %1632 = vmatprep.subr.mxu0 0.0
        %1633 = vmatpush1.msra.mxu0 %v1313
        %1634 = vmatprep.subr.mxu0 0.0
        %1635 = vmatpush1.msra.mxu0 %v1314
        %1636 = vmatprep.subr.mxu0 0.0
        %1637 = vmatpush1.msra.mxu0 %v1315
        %1638 = vmatprep.mubr.f32.mxu0 %v1415
        %1639 = vmatmul.mubr.f32.gmra.mrb[0].mxu0 %v1389
        %v1640 = vpop.f32.mrb[0].mxu0
        %v1641 = vadd.f32 %v1536, %v1640
        %v1642 = vpop.f32.mrb[0].mxu0
        %1643 = vmatprep.mubr.f32.mxu0 %v1417
        %1644 = vmatmul.mubr.f32.gmra.mrb[0].mxu0 %v1391
        %v1645 = vpop.f32.mrb[0].mxu0
        %v1646 = vadd.f32 %v1541, %v1645
        %v1647 = vpop.f32.mrb[0].mxu0
        %1648 = vmatprep.mubr.f32.mxu0 %v1419
        %1649 = vmatmul.mubr.f32.gmra.mrb[0].mxu0 %v1393
        %v1650 = vpop.f32.mrb[0].mxu0
        %v1651 = vadd.f32 %v1546, %v1650
        %v1652 = vpop.f32.mrb[0].mxu0
        %1653 = vmatprep.mubr.f32.mxu0 %v1421
        %1654 = vmatmul.mubr.f32.gmra.mrb[0].mxu0 %v1395
        %v1655 = vpop.f32.mrb[0].mxu0
        %v1656 = vadd.f32 %v1551, %v1655
        %v1657 = vpop.f32.mrb[0].mxu0
        %1658 = vmatprep.mubr.f32.mxu0 %v1423
        %1659 = vmatmul.mubr.f32.gmra.mrb[0].mxu0 %v1397
        %v1660 = vpop.f32.mrb[0].mxu0
        %v1661 = vadd.f32 %v1556, %v1660
        %v1662 = vpop.f32.mrb[0].mxu0
        %1663 = vmatprep.mubr.f32.mxu0 %v1425
        %1664 = vmatmul.mubr.f32.gmra.mrb[0].mxu0 %v1399
        %v1665 = vpop.f32.mrb[0].mxu0
        %v1666 = vadd.f32 %v1561, %v1665
        %v1667 = vpop.f32.mrb[0].mxu0
        %1668 = vmatprep.mubr.f32.mxu0 %v1427
        %1669 = vmatmul.mubr.f32.gmra.mrb[0].mxu0 %v1401
        %v1670 = vpop.f32.mrb[0].mxu0
        %v1671 = vadd.f32 %v1566, %v1670
        %v1672 = vpop.f32.mrb[0].mxu0
        %1673 = vmatprep.mubr.f32.mxu0 %v1429
        %1674 = vmatmul.mubr.f32.gmra.mrb[0].mxu0 %v1403
        %v1675 = vpop.f32.mrb[0].mxu0
        %v1676 = vadd.f32 %v1571, %v1675
        %v1677 = vpop.f32.mrb[0].mxu0
        %1678 = vdwg.mxu0
        %1679 = vmatprep.subr.mxu0 0.0
        %1680 = vmatpush1.msra.mxu0 %v1316
        %1681 = vmatprep.subr.mxu0 0.0
        %1682 = vmatpush1.msra.mxu0 %v1317
        %1683 = vmatprep.subr.mxu0 0.0
        %1684 = vmatpush1.msra.mxu0 %v1318
        %1685 = vmatprep.subr.mxu0 0.0
        %1686 = vmatpush1.msra.mxu0 %v1319
        %1687 = vmatprep.subr.mxu0 0.0
        %1688 = vmatpush1.msra.mxu0 %v1320
        %1689 = vmatprep.subr.mxu0 0.0
        %1690 = vmatpush1.msra.mxu0 %v1321
        %1691 = vmatprep.subr.mxu0 0.0
        %1692 = vmatpush1.msra.mxu0 %v1322
        %1693 = vmatprep.subr.mxu0 0.0
        %1694 = vmatpush1.msra.mxu0 %v1323
        %1695 = vmatprep.subr.mxu0 0.0
        %1696 = vmatpush1.msra.mxu0 %v1324
        %1697 = vmatprep.subr.mxu0 0.0
        %1698 = vmatpush1.msra.mxu0 %v1325
        %1699 = vmatprep.subr.mxu0 0.0
        %1700 = vmatpush1.msra.mxu0 %v1326
        %1701 = vmatprep.subr.mxu0 0.0
        %1702 = vmatpush1.msra.mxu0 %v1327
        %1703 = vmatprep.subr.mxu0 0.0
        %1704 = vmatpush1.msra.mxu0 %v1328
        %1705 = vmatprep.subr.mxu0 0.0
        %1706 = vmatpush1.msra.mxu0 %v1329
        %1707 = vmatprep.subr.mxu0 0.0
        %1708 = vmatpush1.msra.mxu0 %v1330
        %1709 = vmatprep.subr.mxu0 0.0
        %1710 = vmatpush1.msra.mxu0 %v1331
        %1711 = vmatprep.subr.mxu0 0.0
        %1712 = vmatpush1.msra.mxu0 0.0
        %1713 = vmatprep.subr.mxu0 0.0
        %1714 = vmatpush1.msra.mxu0 0.0
        %1715 = vmatprep.subr.mxu0 0.0
        %1716 = vmatpush1.msra.mxu0 0.0
        %1717 = vmatprep.subr.mxu0 0.0
        %1718 = vmatpush1.msra.mxu0 0.0
        %1719 = vmatprep.subr.mxu0 0.0
        %1720 = vmatpush1.msra.mxu0 0.0
        %1721 = vmatprep.subr.mxu0 0.0
        %1722 = vmatpush1.msra.mxu0 0.0
        %1723 = vmatprep.subr.mxu0 0.0
        %1724 = vmatpush1.msra.mxu0 0.0
        %1725 = vmatprep.subr.mxu0 0.0
        %1726 = vmatpush1.msra.mxu0 0.0
        %1727 = vmatprep.subr.mxu0 0.0
        %1728 = vmatpush1.msra.mxu0 0.0
        %1729 = vmatprep.subr.mxu0 0.0
        %1730 = vmatpush1.msra.mxu0 0.0
        %1731 = vmatprep.subr.mxu0 0.0
        %1732 = vmatpush1.msra.mxu0 0.0
        %1733 = vmatprep.subr.mxu0 0.0
        %1734 = vmatpush1.msra.mxu0 0.0
        %1735 = vmatprep.subr.mxu0 0.0
        %1736 = vmatpush1.msra.mxu0 0.0
        %1737 = vmatprep.subr.mxu0 0.0
        %1738 = vmatpush1.msra.mxu0 0.0
        %1739 = vmatprep.subr.mxu0 0.0
        %1740 = vmatpush1.msra.mxu0 0.0
        %1741 = vmatprep.subr.mxu0 0.0
        %1742 = vmatpush1.msra.mxu0 0.0
        %1743 = vmatprep.mubr.f32.mxu0 0.0
        %1744 = vmatmul.mubr.f32.gmra.mrb[0].mxu0 %v1440
        %v1745 = vpop.f32.mrb[0].mxu0
        %v1746 = vadd.f32 %v1641, %v1745
        %v1747 = vpop.f32.mrb[0].mxu0
        %1748 = vmatprep.mubr.f32.mxu0 0.0
        %1749 = vmatmul.mubr.f32.gmra.mrb[0].mxu0 %v1442
        %v1750 = vpop.f32.mrb[0].mxu0
        %v1751 = vadd.f32 %v1646, %v1750
        %v1752 = vpop.f32.mrb[0].mxu0
        %1753 = vmatprep.mubr.f32.mxu0 0.0
        %1754 = vmatmul.mubr.f32.gmra.mrb[0].mxu0 %v1444
        %v1755 = vpop.f32.mrb[0].mxu0
        %v1756 = vadd.f32 %v1651, %v1755
        %v1757 = vpop.f32.mrb[0].mxu0
        %1758 = vmatprep.mubr.f32.mxu0 0.0
        %1759 = vmatmul.mubr.f32.gmra.mrb[0].mxu0 %v1446
        %v1760 = vpop.f32.mrb[0].mxu0
        %v1761 = vadd.f32 %v1656, %v1760
        %v1762 = vpop.f32.mrb[0].mxu0
        %1763 = vmatprep.mubr.f32.mxu0 0.0
        %1764 = vmatmul.mubr.f32.gmra.mrb[0].mxu0 %v1448
        %v1765 = vpop.f32.mrb[0].mxu0
        %v1766 = vadd.f32 %v1661, %v1765
        %v1767 = vpop.f32.mrb[0].mxu0
        %1768 = vmatprep.mubr.f32.mxu0 0.0
        %1769 = vmatmul.mubr.f32.gmra.mrb[0].mxu0 %v1450
        %v1770 = vpop.f32.mrb[0].mxu0
        %v1771 = vadd.f32 %v1666, %v1770
        %v1772 = vpop.f32.mrb[0].mxu0
        %1773 = vmatprep.mubr.f32.mxu0 0.0
        %1774 = vmatmul.mubr.f32.gmra.mrb[0].mxu0 %v1452
        %v1775 = vpop.f32.mrb[0].mxu0
        %v1776 = vadd.f32 %v1671, %v1775
        %v1777 = vpop.f32.mrb[0].mxu0
        %1778 = vmatprep.mubr.f32.mxu0 0.0
        %1779 = vmatmul.mubr.f32.gmra.mrb[0].mxu0 %v1454
        %v1780 = vpop.f32.mrb[0].mxu0
        %v1781 = vadd.f32 %v1676, %v1780
        %v1782 = vpop.f32.mrb[0].mxu0
        %1783 = vdwg.mxu0
        %v1784 = vadd.f32 %v422, %v1746
        %v1785 = vadd.f32 %v423, %v1751
        %v1786 = vadd.f32 %v424, %v1756
        %v1787 = vadd.f32 %v425, %v1761
        %v1788 = vadd.f32 %v426, %v1766
        %v1789 = vadd.f32 %v427, %v1771
        %v1790 = vadd.f32 %v428, %v1776
        %v1791 = vadd.f32 %v429, %v1781
        %v1792 = vld [vmem:[#allocation10] sm:$0xff]
        %v1793 = vld [vmem:[#allocation10 + $0x8] sm:$0xff]
        %v1794 = vld [vmem:[#allocation10 + $0x10] sm:$0xff]
        %v1795 = vld [vmem:[#allocation10 + $0x18] sm:$0xff]
        %v1796 = vld [vmem:[#allocation10 + $0x20] sm:$0xff]
        %v1797 = vld [vmem:[#allocation10 + $0x28] sm:$0xff]
        %v1798 = vld [vmem:[#allocation10 + $0x30] sm:$0xff]
        %v1799 = vld [vmem:[#allocation10 + $0x38] sm:$0xff]
        %v1800 = vld [vmem:[#allocation10 + $0x40] sm:$0xff]
        %v1801 = vld [vmem:[#allocation10 + $0x48] sm:$0xff]
        %v1802 = vld [vmem:[#allocation10 + $0x50] sm:$0xff]
        %v1803 = vld [vmem:[#allocation10 + $0x58] sm:$0xff]
        %v1804 = vld [vmem:[#allocation10 + $0x60] sm:$0xff]
        %v1805 = vld [vmem:[#allocation10 + $0x68] sm:$0xff]
        %v1806 = vld [vmem:[#allocation10 + $0x70] sm:$0xff]
        %v1807 = vld [vmem:[#allocation10 + $0x78] sm:$0xff]
        %v1808 = vld [vmem:[#allocation10 + $0x80] sm:$0xff]
        %v1809 = vld [vmem:[#allocation10 + $0x88] sm:$0xff]
        %v1810 = vld [vmem:[#allocation10 + $0x90] sm:$0xff]
        %v1811 = vld [vmem:[#allocation10 + $0x98] sm:$0xff]
        %v1812 = vld [vmem:[#allocation10 + $0xa0] sm:$0xff]
        %v1813 = vld [vmem:[#allocation10 + $0xa8] sm:$0xff]
        %v1814 = vld [vmem:[#allocation10 + $0xb0] sm:$0xff]
        %v1815 = vld [vmem:[#allocation10 + $0xb8] sm:$0xff]
        %v1816 = vld [vmem:[#allocation10 + $0xc0] sm:$0xff]
        %v1817 = vld [vmem:[#allocation10 + $0xc8] sm:$0xff]
        %v1818 = vld [vmem:[#allocation10 + $0xd0] sm:$0xff]
        %v1819 = vld [vmem:[#allocation10 + $0xd8] sm:$0xff]
        %v1820 = vld [vmem:[#allocation10 + $0xe0] sm:$0xff]
        %v1821 = vld [vmem:[#allocation10 + $0xe8] sm:$0xff]
        %v1822 = vld [vmem:[#allocation10 + $0xf0] sm:$0xff]
        %v1823 = vld [vmem:[#allocation10 + $0xf8] sm:$0xff]
        %v1824 = vld [vmem:[#allocation10 + $0x100] sm:$0xff]
        %v1825 = vld [vmem:[#allocation10 + $0x108] sm:$0xff]
        %v1826 = vld [vmem:[#allocation10 + $0x110] sm:$0xff]
        %v1827 = vld [vmem:[#allocation10 + $0x118] sm:$0xff]
        %v1828 = vld [vmem:[#allocation10 + $0x120] sm:$0xff]
        %v1829 = vld [vmem:[#allocation10 + $0x128] sm:$0xff]
        %v1830 = vld [vmem:[#allocation10 + $0x130] sm:$0xff]
        %v1831 = vld [vmem:[#allocation10 + $0x138] sm:$0xff]
        %v1832 = vld [vmem:[#allocation10 + $0x140] sm:$0xff]
        %v1833 = vld [vmem:[#allocation10 + $0x148] sm:$0xff]
        %v1834 = vld [vmem:[#allocation10 + $0x150] sm:$0xff]
        %v1835 = vld [vmem:[#allocation10 + $0x158] sm:$0xff]
        %v1836 = vld [vmem:[#allocation10 + $0x160] sm:$0xff]
        %v1837 = vld [vmem:[#allocation10 + $0x168] sm:$0xff]
        %v1838 = vld [vmem:[#allocation10 + $0x170] sm:$0xff]
        %v1839 = vld [vmem:[#allocation10 + $0x178] sm:$0xff]
        %v1840 = vld [vmem:[#allocation10 + $0x180] sm:$0xff]
        %v1841 = vld [vmem:[#allocation10 + $0x188] sm:$0xff]
        %v1842 = vld [vmem:[#allocation10 + $0x190] sm:$0xff]
        %v1843 = vld [vmem:[#allocation10 + $0x198] sm:$0xff]
        %v1844 = vld [vmem:[#allocation10 + $0x1a0] sm:$0xff]
        %v1845 = vld [vmem:[#allocation10 + $0x1a8] sm:$0xff]
        %v1846 = vld [vmem:[#allocation10 + $0x1b0] sm:$0xff]
        %v1847 = vld [vmem:[#allocation10 + $0x1b8] sm:$0xff]
        %v1848 = vld [vmem:[#allocation10 + $0x1c0] sm:$0xff]
        %v1849 = vld [vmem:[#allocation10 + $0x1c8] sm:$0xff]
        %v1850 = vld [vmem:[#allocation10 + $0x1d0] sm:$0xff]
        %v1851 = vld [vmem:[#allocation10 + $0x1d8] sm:$0xff]
        %v1852 = vld [vmem:[#allocation10 + $0x1e0] sm:$0xff]
        %v1853 = vld [vmem:[#allocation10 + $0x1e8] sm:$0xff]
        %v1854 = vld [vmem:[#allocation10 + $0x1f0] sm:$0xff]
        %v1855 = vld [vmem:[#allocation10 + $0x1f8] sm:$0xff]
        %v1856 = vld [vmem:[#allocation10 + $0x200] sm:$0xff]
        %v1857 = vld [vmem:[#allocation10 + $0x208] sm:$0xff]
        %v1858 = vld [vmem:[#allocation10 + $0x210] sm:$0xff]
        %v1859 = vld [vmem:[#allocation10 + $0x218] sm:$0xff]
        %v1860 = vld [vmem:[#allocation10 + $0x220] sm:$0xff]
        %v1861 = vld [vmem:[#allocation10 + $0x228] sm:$0xff]
        %v1862 = vld [vmem:[#allocation10 + $0x230] sm:$0xff]
        %v1863 = vld [vmem:[#allocation10 + $0x238] sm:$0xff]
        %v1864 = vld [vmem:[#allocation10 + $0x240] sm:$0xff]
        %v1865 = vld [vmem:[#allocation10 + $0x248] sm:$0xff]
        %v1866 = vld [vmem:[#allocation10 + $0x250] sm:$0xff]
        %v1867 = vld [vmem:[#allocation10 + $0x258] sm:$0xff]
        %v1868 = vld [vmem:[#allocation10 + $0x260] sm:$0xff]
        %v1869 = vld [vmem:[#allocation10 + $0x268] sm:$0xff]
        %v1870 = vld [vmem:[#allocation10 + $0x270] sm:$0xff]
        %v1871 = vld [vmem:[#allocation10 + $0x278] sm:$0xff]
        %v1872 = vld [vmem:[%s8] sm:$0x1]
        %vm1873 = vcmp.gt.f32.partialorder %v1784, 0.0
        %vm1874 = vcmp.gt.f32.partialorder %v1785, 0.0
        %vm1875 = vcmp.gt.f32.partialorder %v1786, 0.0
        %vm1876 = vcmp.gt.f32.partialorder %v1787, 0.0
        %vm1877 = vcmp.gt.f32.partialorder %v1788, 0.0
        %vm1878 = vcmp.gt.f32.partialorder %v1789, 0.0
        %vm1879 = vcmp.gt.f32.partialorder %v1790, 0.0
        %vm1880 = vcmp.gt.f32.partialorder %v1791, 0.0
        %v1881 = vmul.f32 %v1784, 0.1
        %v1882 = vmul.f32 %v1785, 0.1
        %v1883 = vmul.f32 %v1786, 0.1
        %v1884 = vmul.f32 %v1787, 0.1
        %v1885 = vmul.f32 %v1788, 0.1
        %v1886 = vmul.f32 %v1789, 0.1
        %v1887 = vmul.f32 %v1790, 0.1
        %v1888 = vmul.f32 %v1791, 0.1
        %v1889 = vsel %vm1873, %v1784, %v1881
        %v1890 = vsel %vm1874, %v1785, %v1882
        %v1891 = vsel %vm1875, %v1786, %v1883
        %v1892 = vsel %vm1876, %v1787, %v1884
        %v1893 = vsel %vm1877, %v1788, %v1885
        %v1894 = vsel %vm1878, %v1789, %v1886
        %v1895 = vsel %vm1879, %v1790, %v1887
        %v1896 = vsel %vm1880, %v1791, %v1888
        %v1897 = vsel %vm465, %v1889, 0.0
        %v1898 = vsel %vm466, %v1890, 0.0
        %v1899 = vsel %vm467, %v1891, 0.0
        %v1900 = vsel %vm468, %v1892, 0.0
        %v1901 = vsel %vm469, %v1893, 0.0
        %v1902 = vsel %vm470, %v1894, 0.0
        %v1903 = vsel %vm471, %v1895, 0.0
        %v1904 = vsel %vm472, %v1896, 0.0
        %v1913 = vrot.slane %v1897, 4
        %v1914 = vrot.slane %v1898, 4
        %v1915 = vsel %vm617, %v1913, %v1914
        %v1916 = vrot.slane %v1899, 4
        %v1917 = vsel %vm617, %v1914, %v1916
        %v1918 = vrot.slane %v1900, 4
        %v1919 = vsel %vm617, %v1916, %v1918
        %v1920 = vrot.slane %v1901, 4
        %v1921 = vsel %vm617, %v1918, %v1920
        %v1922 = vrot.slane %v1902, 4
        %v1923 = vsel %vm617, %v1920, %v1922
        %v1924 = vrot.slane %v1903, 4
        %v1925 = vsel %vm617, %v1922, %v1924
        %v1926 = vrot.slane %v1904, 4
        %v1927 = vsel %vm617, %v1924, %v1926
        %v1937 = vsel %vm617, 0.0, %v1913
        %v1938 = vsel %vm617, %v1926, 0.0
        %v1941 = vrot.slane %v1937, 2
        %v1942 = vrot.slane %v1915, 2
        %v1943 = vsel %vm591, %v1941, %v1942
        %v1944 = vrot.slane %v1917, 2
        %v1945 = vsel %vm591, %v1942, %v1944
        %v1946 = vrot.slane %v1919, 2
        %v1947 = vsel %vm591, %v1944, %v1946
        %v1948 = vrot.slane %v1921, 2
        %v1949 = vsel %vm591, %v1946, %v1948
        %v1950 = vrot.slane %v1923, 2
        %v1951 = vsel %vm591, %v1948, %v1950
        %v1952 = vrot.slane %v1925, 2
        %v1953 = vsel %vm591, %v1950, %v1952
        %v1954 = vrot.slane %v1927, 2
        %v1955 = vsel %vm591, %v1952, %v1954
        %v1956 = vrot.slane %v1938, 2
        %v1957 = vsel %vm591, %v1954, %v1956
        %v1966 = vrot.slane %v1937, 4
        %v1967 = vrot.slane %v1915, 4
        %v1968 = vsel %vm617, %v1966, %v1967
        %v1969 = vrot.slane %v1917, 4
        %v1970 = vsel %vm617, %v1967, %v1969
        %v1971 = vrot.slane %v1919, 4
        %v1972 = vsel %vm617, %v1969, %v1971
        %v1973 = vrot.slane %v1921, 4
        %v1974 = vsel %vm617, %v1971, %v1973
        %v1975 = vrot.slane %v1923, 4
        %v1976 = vsel %vm617, %v1973, %v1975
        %v1977 = vrot.slane %v1925, 4
        %v1978 = vsel %vm617, %v1975, %v1977
        %v1979 = vrot.slane %v1927, 4
        %v1980 = vsel %vm617, %v1977, %v1979
        %v1981 = vrot.slane %v1938, 4
        %v1982 = vsel %vm617, %v1979, %v1981
        %v1991 = vrot.slane %v1937, 6
        %v1992 = vrot.slane %v1915, 6
        %v1993 = vsel %vm562, %v1991, %v1992
        %v1994 = vrot.slane %v1917, 6
        %v1995 = vsel %vm562, %v1992, %v1994
        %v1996 = vrot.slane %v1919, 6
        %v1997 = vsel %vm562, %v1994, %v1996
        %v1998 = vrot.slane %v1921, 6
        %v1999 = vsel %vm562, %v1996, %v1998
        %v2000 = vrot.slane %v1923, 6
        %v2001 = vsel %vm562, %v1998, %v2000
        %v2002 = vrot.slane %v1925, 6
        %v2003 = vsel %vm562, %v2000, %v2002
        %v2004 = vrot.slane %v1927, 6
        %v2005 = vsel %vm562, %v2002, %v2004
        %v2006 = vrot.slane %v1938, 6
        %v2007 = vsel %vm562, %v2004, %v2006
        %v2017 = vlaneseq
        %v2018 = vshrl.u32 %v2017, 7
        %v2019 = vsub.s32 0, %v2018
        %v2020 = vrot.slane %v1872, %v2019
        %2022 = vmatprep.subr.mxu0 0.0
        %2023 = vmatpush1.msra.mxu0 %v1792
        %2024 = vmatprep.subr.mxu0 0.0
        %2025 = vmatpush1.msra.mxu0 %v1793
        %2026 = vmatprep.subr.mxu0 0.0
        %2027 = vmatpush1.msra.mxu0 %v1794
        %2028 = vmatprep.subr.mxu0 0.0
        %2029 = vmatpush1.msra.mxu0 %v1795
        %2030 = vmatprep.subr.mxu0 0.0
        %2031 = vmatpush1.msra.mxu0 %v1796
        %2032 = vmatprep.subr.mxu0 0.0
        %2033 = vmatpush1.msra.mxu0 %v1797
        %2034 = vmatprep.subr.mxu0 0.0
        %2035 = vmatpush1.msra.mxu0 %v1798
        %2036 = vmatprep.subr.mxu0 0.0
        %2037 = vmatpush1.msra.mxu0 %v1799
        %2038 = vmatprep.subr.mxu0 0.0
        %2039 = vmatpush1.msra.mxu0 %v1800
        %2040 = vmatprep.subr.mxu0 0.0
        %2041 = vmatpush1.msra.mxu0 %v1801
        %2042 = vmatprep.subr.mxu0 0.0
        %2043 = vmatpush1.msra.mxu0 %v1802
        %2044 = vmatprep.subr.mxu0 0.0
        %2045 = vmatpush1.msra.mxu0 %v1803
        %2046 = vmatprep.subr.mxu0 0.0
        %2047 = vmatpush1.msra.mxu0 %v1804
        %2048 = vmatprep.subr.mxu0 0.0
        %2049 = vmatpush1.msra.mxu0 %v1805
        %2050 = vmatprep.subr.mxu0 0.0
        %2051 = vmatpush1.msra.mxu0 %v1806
        %2052 = vmatprep.subr.mxu0 0.0
        %2053 = vmatpush1.msra.mxu0 %v1807
        %2054 = vmatprep.subr.mxu0 0.0
        %2055 = vmatpush1.msra.mxu0 %v1808
        %2056 = vmatprep.subr.mxu0 0.0
        %2057 = vmatpush1.msra.mxu0 %v1809
        %2058 = vmatprep.subr.mxu0 0.0
        %2059 = vmatpush1.msra.mxu0 %v1810
        %2060 = vmatprep.subr.mxu0 0.0
        %2061 = vmatpush1.msra.mxu0 %v1811
        %2062 = vmatprep.subr.mxu0 0.0
        %2063 = vmatpush1.msra.mxu0 %v1812
        %2064 = vmatprep.subr.mxu0 0.0
        %2065 = vmatpush1.msra.mxu0 %v1813
        %2066 = vmatprep.subr.mxu0 0.0
        %2067 = vmatpush1.msra.mxu0 %v1814
        %2068 = vmatprep.subr.mxu0 0.0
        %2069 = vmatpush1.msra.mxu0 %v1815
        %2070 = vmatprep.subr.mxu0 0.0
        %2071 = vmatpush1.msra.mxu0 %v1816
        %2072 = vmatprep.subr.mxu0 0.0
        %2073 = vmatpush1.msra.mxu0 %v1817
        %2074 = vmatprep.subr.mxu0 0.0
        %2075 = vmatpush1.msra.mxu0 %v1818
        %2076 = vmatprep.subr.mxu0 0.0
        %2077 = vmatpush1.msra.mxu0 %v1819
        %2078 = vmatprep.subr.mxu0 0.0
        %2079 = vmatpush1.msra.mxu0 %v1820
        %2080 = vmatprep.subr.mxu0 0.0
        %2081 = vmatpush1.msra.mxu0 %v1821
        %2082 = vmatprep.subr.mxu0 0.0
        %2083 = vmatpush1.msra.mxu0 %v1822
        %2084 = vmatprep.subr.mxu0 0.0
        %2085 = vmatpush1.msra.mxu0 %v1823
        %2086 = vmatprep.mubr.f32.mxu0 %v1943
        %2087 = vmatmul.mubr.f32.gmra.mrb[0].mxu0 %v1937
        %v2088 = vpop.f32.mrb[0].mxu0
        %v2089 = vpop.f32.mrb[0].mxu0
        %2090 = vmatprep.mubr.f32.mxu0 %v1945
        %2091 = vmatmul.mubr.f32.gmra.mrb[0].mxu0 %v1915
        %v2092 = vpop.f32.mrb[0].mxu0
        %v2093 = vpop.f32.mrb[0].mxu0
        %2094 = vmatprep.mubr.f32.mxu0 %v1947
        %2095 = vmatmul.mubr.f32.gmra.mrb[0].mxu0 %v1917
        %v2096 = vpop.f32.mrb[0].mxu0
        %v2097 = vadd.f32 %v2020, %v2096
        %v2098 = vpop.f32.mrb[0].mxu0
        %2099 = vmatprep.mubr.f32.mxu0 %v1949
        %2100 = vmatmul.mubr.f32.gmra.mrb[0].mxu0 %v1919
        %v2101 = vpop.f32.mrb[0].mxu0
        %v2102 = vadd.f32 %v2020, %v2101
        %v2103 = vpop.f32.mrb[0].mxu0
        %2104 = vmatprep.mubr.f32.mxu0 %v1951
        %2105 = vmatmul.mubr.f32.gmra.mrb[0].mxu0 %v1921
        %v2106 = vpop.f32.mrb[0].mxu0
        %v2107 = vadd.f32 %v2020, %v2106
        %v2108 = vpop.f32.mrb[0].mxu0
        %2109 = vmatprep.mubr.f32.mxu0 %v1953
        %2110 = vmatmul.mubr.f32.gmra.mrb[0].mxu0 %v1923
        %v2111 = vpop.f32.mrb[0].mxu0
        %v2112 = vadd.f32 %v2020, %v2111
        %v2113 = vpop.f32.mrb[0].mxu0
        %2114 = vmatprep.mubr.f32.mxu0 %v1955
        %2115 = vmatmul.mubr.f32.gmra.mrb[0].mxu0 %v1925
        %v2116 = vpop.f32.mrb[0].mxu0
        %v2117 = vpop.f32.mrb[0].mxu0
        %2118 = vmatprep.mubr.f32.mxu0 %v1957
        %2119 = vmatmul.mubr.f32.gmra.mrb[0].mxu0 %v1927
        %v2120 = vpop.f32.mrb[0].mxu0
        %v2121 = vpop.f32.mrb[0].mxu0
        %2122 = vdwg.mxu0
        %2123 = vmatprep.subr.mxu0 0.0
        %2124 = vmatpush1.msra.mxu0 %v1824
        %2125 = vmatprep.subr.mxu0 0.0
        %2126 = vmatpush1.msra.mxu0 %v1825
        %2127 = vmatprep.subr.mxu0 0.0
        %2128 = vmatpush1.msra.mxu0 %v1826
        %2129 = vmatprep.subr.mxu0 0.0
        %2130 = vmatpush1.msra.mxu0 %v1827
        %2131 = vmatprep.subr.mxu0 0.0
        %2132 = vmatpush1.msra.mxu0 %v1828
        %2133 = vmatprep.subr.mxu0 0.0
        %2134 = vmatpush1.msra.mxu0 %v1829
        %2135 = vmatprep.subr.mxu0 0.0
        %2136 = vmatpush1.msra.mxu0 %v1830
        %2137 = vmatprep.subr.mxu0 0.0
        %2138 = vmatpush1.msra.mxu0 %v1831
        %2139 = vmatprep.subr.mxu0 0.0
        %2140 = vmatpush1.msra.mxu0 %v1832
        %2141 = vmatprep.subr.mxu0 0.0
        %2142 = vmatpush1.msra.mxu0 %v1833
        %2143 = vmatprep.subr.mxu0 0.0
        %2144 = vmatpush1.msra.mxu0 %v1834
        %2145 = vmatprep.subr.mxu0 0.0
        %2146 = vmatpush1.msra.mxu0 %v1835
        %2147 = vmatprep.subr.mxu0 0.0
        %2148 = vmatpush1.msra.mxu0 %v1836
        %2149 = vmatprep.subr.mxu0 0.0
        %2150 = vmatpush1.msra.mxu0 %v1837
        %2151 = vmatprep.subr.mxu0 0.0
        %2152 = vmatpush1.msra.mxu0 %v1838
        %2153 = vmatprep.subr.mxu0 0.0
        %2154 = vmatpush1.msra.mxu0 %v1839
        %2155 = vmatprep.subr.mxu0 0.0
        %2156 = vmatpush1.msra.mxu0 %v1840
        %2157 = vmatprep.subr.mxu0 0.0
        %2158 = vmatpush1.msra.mxu0 %v1841
        %2159 = vmatprep.subr.mxu0 0.0
        %2160 = vmatpush1.msra.mxu0 %v1842
        %2161 = vmatprep.subr.mxu0 0.0
        %2162 = vmatpush1.msra.mxu0 %v1843
        %2163 = vmatprep.subr.mxu0 0.0
        %2164 = vmatpush1.msra.mxu0 %v1844
        %2165 = vmatprep.subr.mxu0 0.0
        %2166 = vmatpush1.msra.mxu0 %v1845
        %2167 = vmatprep.subr.mxu0 0.0
        %2168 = vmatpush1.msra.mxu0 %v1846
        %2169 = vmatprep.subr.mxu0 0.0
        %2170 = vmatpush1.msra.mxu0 %v1847
        %2171 = vmatprep.subr.mxu0 0.0
        %2172 = vmatpush1.msra.mxu0 %v1848
        %2173 = vmatprep.subr.mxu0 0.0
        %2174 = vmatpush1.msra.mxu0 %v1849
        %2175 = vmatprep.subr.mxu0 0.0
        %2176 = vmatpush1.msra.mxu0 %v1850
        %2177 = vmatprep.subr.mxu0 0.0
        %2178 = vmatpush1.msra.mxu0 %v1851
        %2179 = vmatprep.subr.mxu0 0.0
        %2180 = vmatpush1.msra.mxu0 %v1852
        %2181 = vmatprep.subr.mxu0 0.0
        %2182 = vmatpush1.msra.mxu0 %v1853
        %2183 = vmatprep.subr.mxu0 0.0
        %2184 = vmatpush1.msra.mxu0 %v1854
        %2185 = vmatprep.subr.mxu0 0.0
        %2186 = vmatpush1.msra.mxu0 %v1855
        %2187 = vmatprep.mubr.f32.mxu0 %v1993
        %2188 = vmatmul.mubr.f32.gmra.mrb[0].mxu0 %v1968
        %v2189 = vpop.f32.mrb[0].mxu0
        %v2190 = vpop.f32.mrb[0].mxu0
        %2191 = vmatprep.mubr.f32.mxu0 %v1995
        %2192 = vmatmul.mubr.f32.gmra.mrb[0].mxu0 %v1970
        %v2193 = vpop.f32.mrb[0].mxu0
        %v2194 = vpop.f32.mrb[0].mxu0
        %2195 = vmatprep.mubr.f32.mxu0 %v1997
        %2196 = vmatmul.mubr.f32.gmra.mrb[0].mxu0 %v1972
        %v2197 = vpop.f32.mrb[0].mxu0
        %v2198 = vadd.f32 %v2097, %v2197
        %v2199 = vpop.f32.mrb[0].mxu0
        %2200 = vmatprep.mubr.f32.mxu0 %v1999
        %2201 = vmatmul.mubr.f32.gmra.mrb[0].mxu0 %v1974
        %v2202 = vpop.f32.mrb[0].mxu0
        %v2203 = vadd.f32 %v2102, %v2202
        %v2204 = vpop.f32.mrb[0].mxu0
        %2205 = vmatprep.mubr.f32.mxu0 %v2001
        %2206 = vmatmul.mubr.f32.gmra.mrb[0].mxu0 %v1976
        %v2207 = vpop.f32.mrb[0].mxu0
        %v2208 = vadd.f32 %v2107, %v2207
        %v2209 = vpop.f32.mrb[0].mxu0
        %2210 = vmatprep.mubr.f32.mxu0 %v2003
        %2211 = vmatmul.mubr.f32.gmra.mrb[0].mxu0 %v1978
        %v2212 = vpop.f32.mrb[0].mxu0
        %v2213 = vadd.f32 %v2112, %v2212
        %v2214 = vpop.f32.mrb[0].mxu0
        %2215 = vmatprep.mubr.f32.mxu0 %v2005
        %2216 = vmatmul.mubr.f32.gmra.mrb[0].mxu0 %v1980
        %v2217 = vpop.f32.mrb[0].mxu0
        %v2218 = vpop.f32.mrb[0].mxu0
        %2219 = vmatprep.mubr.f32.mxu0 %v2007
        %2220 = vmatmul.mubr.f32.gmra.mrb[0].mxu0 %v1982
        %v2221 = vpop.f32.mrb[0].mxu0
        %v2222 = vpop.f32.mrb[0].mxu0
        %2223 = vdwg.mxu0
        %2224 = vmatprep.subr.mxu0 0.0
        %2225 = vmatpush1.msra.mxu0 %v1856
        %2226 = vmatprep.subr.mxu0 0.0
        %2227 = vmatpush1.msra.mxu0 %v1857
        %2228 = vmatprep.subr.mxu0 0.0
        %2229 = vmatpush1.msra.mxu0 %v1858
        %2230 = vmatprep.subr.mxu0 0.0
        %2231 = vmatpush1.msra.mxu0 %v1859
        %2232 = vmatprep.subr.mxu0 0.0
        %2233 = vmatpush1.msra.mxu0 %v1860
        %2234 = vmatprep.subr.mxu0 0.0
        %2235 = vmatpush1.msra.mxu0 %v1861
        %2236 = vmatprep.subr.mxu0 0.0
        %2237 = vmatpush1.msra.mxu0 %v1862
        %2238 = vmatprep.subr.mxu0 0.0
        %2239 = vmatpush1.msra.mxu0 %v1863
        %2240 = vmatprep.subr.mxu0 0.0
        %2241 = vmatpush1.msra.mxu0 %v1864
        %2242 = vmatprep.subr.mxu0 0.0
        %2243 = vmatpush1.msra.mxu0 %v1865
        %2244 = vmatprep.subr.mxu0 0.0
        %2245 = vmatpush1.msra.mxu0 %v1866
        %2246 = vmatprep.subr.mxu0 0.0
        %2247 = vmatpush1.msra.mxu0 %v1867
        %2248 = vmatprep.subr.mxu0 0.0
        %2249 = vmatpush1.msra.mxu0 %v1868
        %2250 = vmatprep.subr.mxu0 0.0
        %2251 = vmatpush1.msra.mxu0 %v1869
        %2252 = vmatprep.subr.mxu0 0.0
        %2253 = vmatpush1.msra.mxu0 %v1870
        %2254 = vmatprep.subr.mxu0 0.0
        %2255 = vmatpush1.msra.mxu0 %v1871
        %2256 = vmatprep.subr.mxu0 0.0
        %2257 = vmatpush1.msra.mxu0 0.0
        %2258 = vmatprep.subr.mxu0 0.0
        %2259 = vmatpush1.msra.mxu0 0.0
        %2260 = vmatprep.subr.mxu0 0.0
        %2261 = vmatpush1.msra.mxu0 0.0
        %2262 = vmatprep.subr.mxu0 0.0
        %2263 = vmatpush1.msra.mxu0 0.0
        %2264 = vmatprep.subr.mxu0 0.0
        %2265 = vmatpush1.msra.mxu0 0.0
        %2266 = vmatprep.subr.mxu0 0.0
        %2267 = vmatpush1.msra.mxu0 0.0
        %2268 = vmatprep.subr.mxu0 0.0
        %2269 = vmatpush1.msra.mxu0 0.0
        %2270 = vmatprep.subr.mxu0 0.0
        %2271 = vmatpush1.msra.mxu0 0.0
        %2272 = vmatprep.subr.mxu0 0.0
        %2273 = vmatpush1.msra.mxu0 0.0
        %2274 = vmatprep.subr.mxu0 0.0
        %2275 = vmatpush1.msra.mxu0 0.0
        %2276 = vmatprep.subr.mxu0 0.0
        %2277 = vmatpush1.msra.mxu0 0.0
        %2278 = vmatprep.subr.mxu0 0.0
        %2279 = vmatpush1.msra.mxu0 0.0
        %2280 = vmatprep.subr.mxu0 0.0
        %2281 = vmatpush1.msra.mxu0 0.0
        %2282 = vmatprep.subr.mxu0 0.0
        %2283 = vmatpush1.msra.mxu0 0.0
        %2284 = vmatprep.subr.mxu0 0.0
        %2285 = vmatpush1.msra.mxu0 0.0
        %2286 = vmatprep.subr.mxu0 0.0
        %2287 = vmatpush1.msra.mxu0 0.0
        %2288 = vmatprep.mubr.f32.mxu0 0.0
        %2289 = vmatmul.mubr.f32.gmra.mrb[0].mxu0 %v1915
        %v2290 = vpop.f32.mrb[0].mxu0
        %v2291 = vpop.f32.mrb[0].mxu0
        %2292 = vmatprep.mubr.f32.mxu0 0.0
        %2293 = vmatmul.mubr.f32.gmra.mrb[0].mxu0 %v1917
        %v2294 = vpop.f32.mrb[0].mxu0
        %v2295 = vpop.f32.mrb[0].mxu0
        %2296 = vmatprep.mubr.f32.mxu0 0.0
        %2297 = vmatmul.mubr.f32.gmra.mrb[0].mxu0 %v1919
        %v2298 = vpop.f32.mrb[0].mxu0
        %v2299 = vadd.f32 %v2198, %v2298
        %v2300 = vpop.f32.mrb[0].mxu0
        %2301 = vmatprep.mubr.f32.mxu0 0.0
        %2302 = vmatmul.mubr.f32.gmra.mrb[0].mxu0 %v1921
        %v2303 = vpop.f32.mrb[0].mxu0
        %v2304 = vadd.f32 %v2203, %v2303
        %v2305 = vpop.f32.mrb[0].mxu0
        %2306 = vmatprep.mubr.f32.mxu0 0.0
        %2307 = vmatmul.mubr.f32.gmra.mrb[0].mxu0 %v1923
        %v2308 = vpop.f32.mrb[0].mxu0
        %v2309 = vadd.f32 %v2208, %v2308
        %v2310 = vpop.f32.mrb[0].mxu0
        %2311 = vmatprep.mubr.f32.mxu0 0.0
        %2312 = vmatmul.mubr.f32.gmra.mrb[0].mxu0 %v1925
        %v2313 = vpop.f32.mrb[0].mxu0
        %v2314 = vadd.f32 %v2213, %v2313
        %v2315 = vpop.f32.mrb[0].mxu0
        %2316 = vmatprep.mubr.f32.mxu0 0.0
        %2317 = vmatmul.mubr.f32.gmra.mrb[0].mxu0 %v1927
        %v2318 = vpop.f32.mrb[0].mxu0
        %v2319 = vpop.f32.mrb[0].mxu0
        %2320 = vmatprep.mubr.f32.mxu0 0.0
        %2321 = vmatmul.mubr.f32.gmra.mrb[0].mxu0 %v1938
        %v2322 = vpop.f32.mrb[0].mxu0
        %v2323 = vpop.f32.mrb[0].mxu0
        %2324 = vdwg.mxu0
        %v2325 = vadd.f32 %v1786, %v2299
        %v2326 = vadd.f32 %v1787, %v2304
        %v2327 = vadd.f32 %v1788, %v2309
        %v2328 = vadd.f32 %v1789, %v2314
        %v2329 = vadd.f32 %v1248, %v2325
        %v2330 = vadd.f32 %v1249, %v2326
        %v2331 = vadd.f32 %v1250, %v2327
        %v2332 = vadd.f32 %v1251, %v2328
        %v2333 = vmul.f32 %v2329, 0.5
        %v2334 = vmul.f32 %v2330, 0.5
        %v2335 = vmul.f32 %v2331, 0.5
        %v2336 = vmul.f32 %v2332, 0.5
        %2337 = vst [vmem:[%s357] sm:$0xff] %v2333
        %2338 = vst [vmem:[%s357 + $0x8] sm:$0xff] %v2334
        %2339 = vst [vmem:[%s357 + $0x10] sm:$0xff] %v2335
        %2340 = vst [vmem:[%s357 + $0x18] sm:$0xff] %v2336
        %s2341 = sand.u32 %s216, 1
        %s2342 = scalar_lea.sflag [#allocation6], %s2341
        %s2343 = sand.u32 %s216, 1
        %s2344 = smul.addr %s2343, 32
        %s2345 = scalar_lea.vmem [#allocation12], %s2344
        // Predicated region
        $region85: #{tpu_custom_call.1} parent=51 // pred_check
          %p2346 = pneg %p226
        $region86: #{tpu_custom_call.1} parent=51 // pred_check_branch
          %2348 = sbr.rel (%p2346) target = $region88
        $region87: #{tpu_custom_call.1} parent=51 // pred_region
          %s2349 = smul.u32 4, %s31
          %s2351 = ssub.s32 512, 512
          %2352 = vsyncadd %s2342, %s2351
          %s2353 = smul.addr %s30, 12
          %s2354 = sadd.s32 %s2349, %s2353
          %s2355 = smul.addr %s2354, 128
          %s2356 = scalar_lea.hbm %s9, %s2355
          %s2357 = sshll.u32 %s2345, 4
          %s2358 = int_to_ptr.vmem [resolvable:$true] %s2357
          %2363 = dma.vmem_to_hbm [thread:$0]  %s2358, 512, %s2356, %s2342, 128, 128, 8
        $region88: #{tpu_custom_call.1} parent=51 // pred_fallthru
          _
      $region52: #{tpu_custom_call.1} parent=5 // pred_fallthru
        _
      %p2364 = scmp.le.s32.totalorder 2, %s21
      // Predicated region
      $region89: #{tpu_custom_call.1} parent=5 // pred_check
        %p2365 = pneg %p2364
      $region90: #{tpu_custom_call.1} parent=5 // pred_check_branch
        %2367 = sbr.rel (%p2365) target = $region92
      $region91: #{tpu_custom_call.1} parent=5 // pred_region
        %s2368 = ssub.s32 %s21, 2
        // Predicated region
        $region93: #{tpu_custom_call.1} parent=91 // pred_check
          %p2369 = pneg %p232
        $region94: #{tpu_custom_call.1} parent=91 // pred_check_branch
          %2371 = sbr.rel (%p2369) target = $region96
        $region95: #{tpu_custom_call.1} parent=91 // pred_region
          %s2372 = sand.u32 %s217, 1
          %s2373 = scalar_lea.sflag [#allocation6], %s2372
          %s2374 = sand.u32 %s217, 1
          %s2375 = smul.addr %s2374, 32
          %s2376 = scalar_lea.vmem [#allocation12], %s2375
          %2377 = dma.done %s2373, 512
        $region96: #{tpu_custom_call.1} parent=91 // pred_fallthru
          _
      $region92: #{tpu_custom_call.1} parent=5 // pred_fallthru
        _
    $region6: #{tpu_custom_call.1} parent=1 // loop_footer
      %s25 = sadd.s32 1, %s21
    $region7: #{tpu_custom_call.1} parent=1 // loop_footer_branch
      %20 = sbr.rel target = $region3
    $region8: #{tpu_custom_call.1} parent=1 // loop_exit
      _
    %2378 = vsyncpa [#allocation5], 1
    %s2379 = scalar_lea.sflag [#allocation5], 1
    %2380 = vsyncpa %s2379, 1
    %2381 = vsyncpa [#allocation8], 1
    %2382 = vsyncpa [#allocation11], 1
    %2383 = vsyncpa [#allocation6], 1
    %s2384 = scalar_lea.sflag [#allocation6], 1
    %2385 = vsyncpa %s2384, 1
  %2386 = vsyncmov [#allocation3]
  %s2387 = vpop.sfrf %2386
  %p2388 = scmp.eq.s32.totalorder %s2387, 0
  %p2389 = pneg %p2388
  %2391 = shalt.err (%p2389)
  %s2392 = scalar_lea.sflag [#allocation3], 1
  %2393 = vsyncmov %s2392
  %s2394 = vpop.sfrf %2393
  %p2395 = scmp.eq.s32.totalorder %s2394, 0
  %p2396 = pneg %p2395
  %2398 = shalt.err (%p2396)

</llo_original>
